<compile_context>
chip_gen: v7x
topology: tpu7x:2x2x1
jax: 0.10.0
libtpu: 0.0.40
codegen_flags: <defaults>
</compile_context>

<pallas_src>
import functools

import jax
import jax.numpy as jnp
from jax.experimental import pallas as pl
from jax.experimental.pallas import tpu as pltpu


def _outconv_kernel(xh_ref, xl_ref, wh_ref, wl_ref, uw_ref, b_ref, o_ref,
                    *, n_low_rows, w_hi, w_lo):
    # xh_ref: (Ch, tile_m)       xl_ref: (Cl, tile_m // 4)
    # wh_ref: (out_ch, Ch)       wl_ref: (out_ch, Cl)
    # uw_ref: (W/2, W) 0/1       b_ref : (out_ch, 1)
    # o_ref : (out_ch, tile_m)   tile_m = th * W, th = 2 * n_low_rows

    # high-frequency branch: Y^T = W_h2h @ X_h  -> single full-width lane-dense store
    acc = jnp.dot(wh_ref[...], xh_ref[...], preferred_element_type=jnp.float32)
    o_ref[...] = (acc + b_ref[...]).astype(o_ref.dtype)

    # low-frequency branch at LOW resolution (1x1 conv commutes with nearest upsample)
    zl = jnp.dot(wl_ref[...], xl_ref[...], preferred_element_type=jnp.float32)

    # exact nearest-neighbor 2x2 upsample, separable & linear cost:
    #   W-dup: (out_ch, W/2) @ (W/2, W) 0/1 matrix per low row
    #   H-dup: add the same upsampled row into the two output rows (static lane ranges)
    for r in range(n_low_rows):
        zr = zl[:, r * w_lo:(r + 1) * w_lo]                                   # (out_ch, W/2)
        zw = jnp.dot(zr, uw_ref[...], preferred_element_type=jnp.float32)     # (out_ch, W)
        zw = zw.astype(o_ref.dtype)
        lo0 = (2 * r) * w_hi
        lo1 = (2 * r + 1) * w_hi
        o_ref[:, lo0:lo0 + w_hi] = o_ref[:, lo0:lo0 + w_hi] + zw
        o_ref[:, lo1:lo1 + w_hi] = o_ref[:, lo1:lo1 + w_hi] + zw


def _pick_tile_m(H, W, n_batch, target=8192, max_rows=128):
    """tile_m = th*W, th an even divisor of H, with (8,128)-legal high/low lane dims.

    max_rows caps the rows per tile so the static per-low-row loop stays short.
    When n_batch == 1, prefer >= 2 spatial tiles so both v7x TensorCores get work.
    """
    HW = H * W
    cands = []
    for th in range(2, H + 1, 2):
        if H % th:
            continue
        tm = th * W
        full = tm == HW
        if th > max_rows and not full:
            continue
        ok_hi = (tm % 128 == 0) or full            # high-res block lane dim
        ok_lo = ((tm // 4) % 128 == 0) or full     # low-res block lane dim
        if ok_hi and ok_lo:
            cands.append(tm)
    if not cands:
        return HW                                  # full-image block is always legal
    if n_batch < 2:
        split = [t for t in cands if t <= HW // 2]
        if split:
            cands = split
    under = [t for t in cands if t <= target]
    return max(under) if under else min(cands)


def outconv_forward(x_h, x_l, w_h2h, w_l2h, b_h2h, b_l2h, *, max_tile_m=8192):
    """OctaveConv(k=1, alpha_in=0.5, alpha_out=0) forward. Returns (y_h, None)."""
    N, Ch, H, W = x_h.shape
    Nl, Cl, Hl, Wl = x_l.shape
    assert Nl == N and H % 2 == 0 and W % 2 == 0 and Hl == H // 2 and Wl == W // 2
    out_ch = w_h2h.shape[0]
    HWh, HWl = H * W, Hl * Wl

    tile_m = _pick_tile_m(H, W, N, target=max_tile_m)
    n_tiles = HWh // tile_m
    tl = tile_m // 4
    th = tile_m // W          # high-res rows per tile (even)
    th_l = th // 2            # low-res rows per tile

    # metadata-only reshapes: no transposes, no upsampled-input materialization
    xh3 = x_h.reshape(N, Ch, HWh)
    xl3 = x_l.reshape(N, Cl, HWl)
    wh = w_h2h.reshape(out_ch, Ch)
    wl = w_l2h.reshape(out_ch, Cl)
    bias = (b_h2h + b_l2h).reshape(out_ch, 1).astype(jnp.float32)

    # small constant W-direction nearest-upsample matrix: Uw[a, w] = 1 iff w // 2 == a
    Uw = (jnp.arange(Wl, dtype=jnp.int32)[:, None]
          == (jnp.arange(W, dtype=jnp.int32)[None, :] // 2)).astype(jnp.float32)

    kernel = functools.partial(_outconv_kernel, n_low_rows=th_l, w_hi=W, w_lo=Wl)

    flops = (2 * N * HWh * out_ch * Ch          # high-frequency 1x1 conv
             + 2 * N * HWl * out_ch * Cl        # low-frequency 1x1 conv (at low res)
             + 2 * N * HWl * out_ch * W)        # W-direction upsample matmuls
    bytes_accessed = 4 * (N * Ch * HWh + N * Cl * HWl + N * out_ch * HWh
                          + out_ch * (Ch + Cl + 1) + Wl * W)

    y3 = pl.pallas_call(
        kernel,
        out_shape=jax.ShapeDtypeStruct((N, out_ch, HWh), x_h.dtype),
        grid_spec=pltpu.PrefetchScalarGridSpec(
            num_scalar_prefetch=0,
            grid=(N, n_tiles),
            in_specs=[
                # leading batch dim is squeezed (None) -> kernel refs are 2-D
                pl.BlockSpec((None, Ch, tile_m), lambda n, i: (n, 0, i)),
                pl.BlockSpec((None, Cl, tl), lambda n, i: (n, 0, i)),
                pl.BlockSpec((out_ch, Ch), lambda n, i: (0, 0)),
                pl.BlockSpec((out_ch, Cl), lambda n, i: (0, 0)),
                pl.BlockSpec((Wl, W), lambda n, i: (0, 0)),
                pl.BlockSpec((out_ch, 1), lambda n, i: (0, 0)),
            ],
            out_specs=pl.BlockSpec((None, out_ch, tile_m), lambda n, i: (n, 0, i)),
        ),
        compiler_params=pltpu.CompilerParams(
            dimension_semantics=("parallel", "parallel")),
        cost_estimate=pl.CostEstimate(flops=flops, transcendentals=0,
                                      bytes_accessed=bytes_accessed),
    )(xh3, xl3, wh, wl, Uw, bias)

    y_h = y3.reshape(N, out_ch, H, W)   # metadata-only
    return y_h, None                    # alpha_out == 0 -> low-frequency output is None


if __name__ == "__main__":
    key = jax.random.PRNGKey(0)
    k1, k2, k3, k4, k5, k6 = jax.random.split(key, 6)

    N, in_ch, out_ch, H, W = 2, 4, 3, 16, 16
    ch_l = int(0.5 * in_ch)          # alpha_in = 0.5
    ch_h = in_ch - ch_l

    x_h = jax.random.normal(k1, (N, ch_h, H, W), jnp.float32)
    x_l = jax.random.normal(k2, (N, ch_l, H // 2, W // 2), jnp.float32)

    # deterministic parameter init for conv_h2h / conv_l2h (1x1 Conv2d weights + biases)
    w_h2h = jax.random.normal(k3, (out_ch, ch_h, 1, 1), jnp.float32) * 0.1
    w_l2h = jax.random.normal(k4, (out_ch, ch_l, 1, 1), jnp.float32) * 0.1
    b_h2h = jax.random.normal(k5, (out_ch,), jnp.float32) * 0.1
    b_l2h = jax.random.normal(k6, (out_ch,), jnp.float32) * 0.1

    y_h, y_l = outconv_forward(x_h, x_l, w_h2h, w_l2h, b_h2h, b_l2h)
    y_h = jax.block_until_ready(y_h)

    # pure-JAX reference check of the OctaveConv forward
    ref_h = jnp.einsum('nchw,oc->nohw', x_h, w_h2h.reshape(out_ch, ch_h))
    x_l_up = jnp.repeat(jnp.repeat(x_l, 2, axis=2), 2, axis=3)
    ref_l = jnp.einsum('nchw,oc->nohw', x_l_up, w_l2h.reshape(out_ch, ch_l))
    ref = ref_h + ref_l + (b_h2h + b_l2h)[None, :, None, None]
    assert y_l is None
    assert jnp.allclose(y_h, ref, atol=1e-4, rtol=1e-4)
    print("KERNEL_OK")
</pallas_src>

<mosaic_0001>
module attributes {stable_mosaic.version = 11 : i64} {
  func.func @_outconv_kernel(%arg0: i32, %arg1: i32, %arg2: memref<1x2x256xf32, #tpu.memory_space<vmem>>, %arg3: memref<1x2x64xf32, #tpu.memory_space<vmem>>, %arg4: memref<3x2xf32, #tpu.memory_space<vmem>>, %arg5: memref<3x2xf32, #tpu.memory_space<vmem>>, %arg6: memref<8x16xf32, #tpu.memory_space<vmem>>, %arg7: memref<3x1xf32, #tpu.memory_space<vmem>>, %arg8: memref<1x3x256xf32, #tpu.memory_space<vmem>>) attributes {dimension_semantics = [#tpu.dimension_semantics<parallel>, #tpu.dimension_semantics<parallel>], iteration_bounds = array<i64: 2, 1>, scalar_prefetch = 0 : i64, scratch_operands = 0 : i64, tpu.core_type = #tpu.core_type<tc>, window_params = [{transform_indices = @transform_0, window_bounds = array<i64: 1, 2, 256>}, {transform_indices = @transform_1, window_bounds = array<i64: 1, 2, 64>}, {pipeline_mode = #tpu.pipeline_mode<synchronous>, transform_indices = @transform_2, window_bounds = array<i64: 3, 2>}, {pipeline_mode = #tpu.pipeline_mode<synchronous>, transform_indices = @transform_3, window_bounds = array<i64: 3, 2>}, {pipeline_mode = #tpu.pipeline_mode<synchronous>, transform_indices = @transform_4, window_bounds = array<i64: 8, 16>}, {pipeline_mode = #tpu.pipeline_mode<synchronous>, transform_indices = @transform_5, window_bounds = array<i64: 3, 1>}, {transform_indices = @transform_6, window_bounds = array<i64: 1, 3, 256>}]} {
    %c0 = arith.constant 0 : index
    %c0_0 = arith.constant 0 : index
    %0 = vector.load %arg4[%c0, %c0_0] : memref<3x2xf32, #tpu.memory_space<vmem>>, vector<3x2xf32>
    %c0_1 = arith.constant 0 : index
    %c0_2 = arith.constant 0 : index
    %c0_3 = arith.constant 0 : index
    %1 = vector.load %arg2[%c0_1, %c0_2, %c0_3] : memref<1x2x256xf32, #tpu.memory_space<vmem>>, vector<1x2x256xf32>
    %2 = vector.shape_cast %1 : vector<1x2x256xf32> to vector<2x256xf32>
    %cst = arith.constant dense<0.000000e+00> : vector<3x256xf32>
    %3 = tpu.matmul %0, %2, %cst {dimension_numbers = #tpu.dot_dimension_numbers<[1], [0], [0], [1], [0, 0, 1, 1], [], []>} : vector<3x2xf32>, vector<2x256xf32>, vector<3x256xf32> -> vector<3x256xf32>
    %c0_4 = arith.constant 0 : index
    %c0_5 = arith.constant 0 : index
    %4 = vector.load %arg7[%c0_4, %c0_5] : memref<3x1xf32, #tpu.memory_space<vmem>>, vector<3x1xf32>
    %5 = vector.broadcast %4 : vector<3x1xf32> to vector<3x256xf32>
    %6 = arith.addf %3, %5 : vector<3x256xf32>
    %c0_6 = arith.constant 0 : index
    %c0_7 = arith.constant 0 : index
    %c0_8 = arith.constant 0 : index
    %7 = vector.load %arg8[%c0_6, %c0_7, %c0_8] : memref<1x3x256xf32, #tpu.memory_space<vmem>>, vector<1x3x256xf32>
    %8 = vector.shape_cast %7 : vector<1x3x256xf32> to vector<3x256xf32>
    %9 = vector.shape_cast %6 : vector<3x256xf32> to vector<1x3x256xf32>
    tpu.vector_store %arg8[%c0_6, %c0_7, %c0_8], %9 {strides = array<i32>} : memref<1x3x256xf32, #tpu.memory_space<vmem>>, vector<1x3x256xf32>,
    %c0_9 = arith.constant 0 : index
    %c0_10 = arith.constant 0 : index
    %10 = vector.load %arg5[%c0_9, %c0_10] : memref<3x2xf32, #tpu.memory_space<vmem>>, vector<3x2xf32>
    %c0_11 = arith.constant 0 : index
    %c0_12 = arith.constant 0 : index
    %c0_13 = arith.constant 0 : index
    %11 = vector.load %arg3[%c0_11, %c0_12, %c0_13] : memref<1x2x64xf32, #tpu.memory_space<vmem>>, vector<1x2x64xf32>
    %12 = vector.shape_cast %11 : vector<1x2x64xf32> to vector<2x64xf32>
    %cst_14 = arith.constant dense<0.000000e+00> : vector<3x64xf32>
    %13 = tpu.matmul %10, %12, %cst_14 {dimension_numbers = #tpu.dot_dimension_numbers<[1], [0], [0], [1], [0, 0, 1, 1], [], []>} : vector<3x2xf32>, vector<2x64xf32>, vector<3x64xf32> -> vector<3x64xf32>
    %14 = vector.extract_strided_slice %13 {offsets = [0, 0], sizes = [3, 8], strides = [1, 1]} : vector<3x64xf32> to vector<3x8xf32>
    %c0_15 = arith.constant 0 : index
    %c0_16 = arith.constant 0 : index
    %15 = vector.load %arg6[%c0_15, %c0_16] : memref<8x16xf32, #tpu.memory_space<vmem>>, vector<8x16xf32>
    %cst_17 = arith.constant dense<0.000000e+00> : vector<3x16xf32>
    %16 = tpu.matmul %14, %15, %cst_17 {dimension_numbers = #tpu.dot_dimension_numbers<[1], [0], [0], [1], [0, 0, 1, 1], [], []>} : vector<3x8xf32>, vector<8x16xf32>, vector<3x16xf32> -> vector<3x16xf32>
    %c0_18 = arith.constant 0 : index
    %c0_19 = arith.constant 0 : index
    %c0_20 = arith.constant 0 : index
    %17 = vector.load %arg8[%c0_18, %c0_19, %c0_20] : memref<1x3x256xf32, #tpu.memory_space<vmem>>, vector<1x3x16xf32>
    %18 = vector.shape_cast %17 : vector<1x3x16xf32> to vector<3x16xf32>
    %19 = arith.addf %18, %16 : vector<3x16xf32>
    %c0_21 = arith.constant 0 : index
    %c0_22 = arith.constant 0 : index
    %c0_23 = arith.constant 0 : index
    %20 = vector.load %arg8[%c0_21, %c0_22, %c0_23] : memref<1x3x256xf32, #tpu.memory_space<vmem>>, vector<1x3x16xf32>
    %21 = vector.shape_cast %20 : vector<1x3x16xf32> to vector<3x16xf32>
    %22 = vector.shape_cast %19 : vector<3x16xf32> to vector<1x3x16xf32>
    tpu.vector_store %arg8[%c0_21, %c0_22, %c0_23], %22 {strides = array<i32>} : memref<1x3x256xf32, #tpu.memory_space<vmem>>, vector<1x3x16xf32>,
    %c0_24 = arith.constant 0 : index
    %c0_25 = arith.constant 0 : index
    %c16 = arith.constant 16 : index
    %23 = vector.load %arg8[%c0_24, %c0_25, %c16] : memref<1x3x256xf32, #tpu.memory_space<vmem>>, vector<1x3x16xf32>
    %24 = vector.shape_cast %23 : vector<1x3x16xf32> to vector<3x16xf32>
    %25 = arith.addf %24, %16 : vector<3x16xf32>
    %c0_26 = arith.constant 0 : index
    %c0_27 = arith.constant 0 : index
    %c16_28 = arith.constant 16 : index
    %26 = vector.load %arg8[%c0_26, %c0_27, %c16_28] : memref<1x3x256xf32, #tpu.memory_space<vmem>>, vector<1x3x16xf32>
    %27 = vector.shape_cast %26 : vector<1x3x16xf32> to vector<3x16xf32>
    %28 = vector.shape_cast %25 : vector<3x16xf32> to vector<1x3x16xf32>
    tpu.vector_store %arg8[%c0_26, %c0_27, %c16_28], %28 {strides = array<i32>} : memref<1x3x256xf32, #tpu.memory_space<vmem>>, vector<1x3x16xf32>,
    %29 = vector.extract_strided_slice %13 {offsets = [0, 8], sizes = [3, 8], strides = [1, 1]} : vector<3x64xf32> to vector<3x8xf32>
    %c0_29 = arith.constant 0 : index
    %c0_30 = arith.constant 0 : index
    %30 = vector.load %arg6[%c0_29, %c0_30] : memref<8x16xf32, #tpu.memory_space<vmem>>, vector<8x16xf32>
    %cst_31 = arith.constant dense<0.000000e+00> : vector<3x16xf32>
    %31 = tpu.matmul %29, %30, %cst_31 {dimension_numbers = #tpu.dot_dimension_numbers<[1], [0], [0], [1], [0, 0, 1, 1], [], []>} : vector<3x8xf32>, vector<8x16xf32>, vector<3x16xf32> -> vector<3x16xf32>
    %c0_32 = arith.constant 0 : index
    %c0_33 = arith.constant 0 : index
    %c32 = arith.constant 32 : index
    %32 = vector.load %arg8[%c0_32, %c0_33, %c32] : memref<1x3x256xf32, #tpu.memory_space<vmem>>, vector<1x3x16xf32>
    %33 = vector.shape_cast %32 : vector<1x3x16xf32> to vector<3x16xf32>
    %34 = arith.addf %33, %31 : vector<3x16xf32>
    %c0_34 = arith.constant 0 : index
    %c0_35 = arith.constant 0 : index
    %c32_36 = arith.constant 32 : index
    %35 = vector.load %arg8[%c0_34, %c0_35, %c32_36] : memref<1x3x256xf32, #tpu.memory_space<vmem>>, vector<1x3x16xf32>
    %36 = vector.shape_cast %35 : vector<1x3x16xf32> to vector<3x16xf32>
    %37 = vector.shape_cast %34 : vector<3x16xf32> to vector<1x3x16xf32>
    tpu.vector_store %arg8[%c0_34, %c0_35, %c32_36], %37 {strides = array<i32>} : memref<1x3x256xf32, #tpu.memory_space<vmem>>, vector<1x3x16xf32>,
    %c0_37 = arith.constant 0 : index
    %c0_38 = arith.constant 0 : index
    %c48 = arith.constant 48 : index
    %38 = vector.load %arg8[%c0_37, %c0_38, %c48] : memref<1x3x256xf32, #tpu.memory_space<vmem>>, vector<1x3x16xf32>
    %39 = vector.shape_cast %38 : vector<1x3x16xf32> to vector<3x16xf32>
    %40 = arith.addf %39, %31 : vector<3x16xf32>
    %c0_39 = arith.constant 0 : index
    %c0_40 = arith.constant 0 : index
    %c48_41 = arith.constant 48 : index
    %41 = vector.load %arg8[%c0_39, %c0_40, %c48_41] : memref<1x3x256xf32, #tpu.memory_space<vmem>>, vector<1x3x16xf32>
    %42 = vector.shape_cast %41 : vector<1x3x16xf32> to vector<3x16xf32>
    %43 = vector.shape_cast %40 : vector<3x16xf32> to vector<1x3x16xf32>
    tpu.vector_store %arg8[%c0_39, %c0_40, %c48_41], %43 {strides = array<i32>} : memref<1x3x256xf32, #tpu.memory_space<vmem>>, vector<1x3x16xf32>,
    %44 = vector.extract_strided_slice %13 {offsets = [0, 16], sizes = [3, 8], strides = [1, 1]} : vector<3x64xf32> to vector<3x8xf32>
    %c0_42 = arith.constant 0 : index
    %c0_43 = arith.constant 0 : index
    %45 = vector.load %arg6[%c0_42, %c0_43] : memref<8x16xf32, #tpu.memory_space<vmem>>, vector<8x16xf32>
    %cst_44 = arith.constant dense<0.000000e+00> : vector<3x16xf32>
    %46 = tpu.matmul %44, %45, %cst_44 {dimension_numbers = #tpu.dot_dimension_numbers<[1], [0], [0], [1], [0, 0, 1, 1], [], []>} : vector<3x8xf32>, vector<8x16xf32>, vector<3x16xf32> -> vector<3x16xf32>
    %c0_45 = arith.constant 0 : index
    %c0_46 = arith.constant 0 : index
    %c64 = arith.constant 64 : index
    %47 = vector.load %arg8[%c0_45, %c0_46, %c64] : memref<1x3x256xf32, #tpu.memory_space<vmem>>, vector<1x3x16xf32>
    %48 = vector.shape_cast %47 : vector<1x3x16xf32> to vector<3x16xf32>
    %49 = arith.addf %48, %46 : vector<3x16xf32>
    %c0_47 = arith.constant 0 : index
    %c0_48 = arith.constant 0 : index
    %c64_49 = arith.constant 64 : index
    %50 = vector.load %arg8[%c0_47, %c0_48, %c64_49] : memref<1x3x256xf32, #tpu.memory_space<vmem>>, vector<1x3x16xf32>
    %51 = vector.shape_cast %50 : vector<1x3x16xf32> to vector<3x16xf32>
    %52 = vector.shape_cast %49 : vector<3x16xf32> to vector<1x3x16xf32>
    tpu.vector_store %arg8[%c0_47, %c0_48, %c64_49], %52 {strides = array<i32>} : memref<1x3x256xf32, #tpu.memory_space<vmem>>, vector<1x3x16xf32>,
    %c0_50 = arith.constant 0 : index
    %c0_51 = arith.constant 0 : index
    %c80 = arith.constant 80 : index
    %53 = vector.load %arg8[%c0_50, %c0_51, %c80] : memref<1x3x256xf32, #tpu.memory_space<vmem>>, vector<1x3x16xf32>
    %54 = vector.shape_cast %53 : vector<1x3x16xf32> to vector<3x16xf32>
    %55 = arith.addf %54, %46 : vector<3x16xf32>
    %c0_52 = arith.constant 0 : index
    %c0_53 = arith.constant 0 : index
    %c80_54 = arith.constant 80 : index
    %56 = vector.load %arg8[%c0_52, %c0_53, %c80_54] : memref<1x3x256xf32, #tpu.memory_space<vmem>>, vector<1x3x16xf32>
    %57 = vector.shape_cast %56 : vector<1x3x16xf32> to vector<3x16xf32>
    %58 = vector.shape_cast %55 : vector<3x16xf32> to vector<1x3x16xf32>
    tpu.vector_store %arg8[%c0_52, %c0_53, %c80_54], %58 {strides = array<i32>} : memref<1x3x256xf32, #tpu.memory_space<vmem>>, vector<1x3x16xf32>,
    %59 = vector.extract_strided_slice %13 {offsets = [0, 24], sizes = [3, 8], strides = [1, 1]} : vector<3x64xf32> to vector<3x8xf32>
    %c0_55 = arith.constant 0 : index
    %c0_56 = arith.constant 0 : index
    %60 = vector.load %arg6[%c0_55, %c0_56] : memref<8x16xf32, #tpu.memory_space<vmem>>, vector<8x16xf32>
    %cst_57 = arith.constant dense<0.000000e+00> : vector<3x16xf32>
    %61 = tpu.matmul %59, %60, %cst_57 {dimension_numbers = #tpu.dot_dimension_numbers<[1], [0], [0], [1], [0, 0, 1, 1], [], []>} : vector<3x8xf32>, vector<8x16xf32>, vector<3x16xf32> -> vector<3x16xf32>
    %c0_58 = arith.constant 0 : index
    %c0_59 = arith.constant 0 : index
    %c96 = arith.constant 96 : index
    %62 = vector.load %arg8[%c0_58, %c0_59, %c96] : memref<1x3x256xf32, #tpu.memory_space<vmem>>, vector<1x3x16xf32>
    %63 = vector.shape_cast %62 : vector<1x3x16xf32> to vector<3x16xf32>
    %64 = arith.addf %63, %61 : vector<3x16xf32>
    %c0_60 = arith.constant 0 : index
    %c0_61 = arith.constant 0 : index
    %c96_62 = arith.constant 96 : index
    %65 = vector.load %arg8[%c0_60, %c0_61, %c96_62] : memref<1x3x256xf32, #tpu.memory_space<vmem>>, vector<1x3x16xf32>
    %66 = vector.shape_cast %65 : vector<1x3x16xf32> to vector<3x16xf32>
    %67 = vector.shape_cast %64 : vector<3x16xf32> to vector<1x3x16xf32>
    tpu.vector_store %arg8[%c0_60, %c0_61, %c96_62], %67 {strides = array<i32>} : memref<1x3x256xf32, #tpu.memory_space<vmem>>, vector<1x3x16xf32>,
    %c0_63 = arith.constant 0 : index
    %c0_64 = arith.constant 0 : index
    %c112 = arith.constant 112 : index
    %68 = vector.load %arg8[%c0_63, %c0_64, %c112] : memref<1x3x256xf32, #tpu.memory_space<vmem>>, vector<1x3x16xf32>
    %69 = vector.shape_cast %68 : vector<1x3x16xf32> to vector<3x16xf32>
    %70 = arith.addf %69, %61 : vector<3x16xf32>
    %c0_65 = arith.constant 0 : index
    %c0_66 = arith.constant 0 : index
    %c112_67 = arith.constant 112 : index
    %71 = vector.load %arg8[%c0_65, %c0_66, %c112_67] : memref<1x3x256xf32, #tpu.memory_space<vmem>>, vector<1x3x16xf32>
    %72 = vector.shape_cast %71 : vector<1x3x16xf32> to vector<3x16xf32>
    %73 = vector.shape_cast %70 : vector<3x16xf32> to vector<1x3x16xf32>
    tpu.vector_store %arg8[%c0_65, %c0_66, %c112_67], %73 {strides = array<i32>} : memref<1x3x256xf32, #tpu.memory_space<vmem>>, vector<1x3x16xf32>,
    %74 = vector.extract_strided_slice %13 {offsets = [0, 32], sizes = [3, 8], strides = [1, 1]} : vector<3x64xf32> to vector<3x8xf32>
    %c0_68 = arith.constant 0 : index
    %c0_69 = arith.constant 0 : index
    %75 = vector.load %arg6[%c0_68, %c0_69] : memref<8x16xf32, #tpu.memory_space<vmem>>, vector<8x16xf32>
    %cst_70 = arith.constant dense<0.000000e+00> : vector<3x16xf32>
    %76 = tpu.matmul %74, %75, %cst_70 {dimension_numbers = #tpu.dot_dimension_numbers<[1], [0], [0], [1], [0, 0, 1, 1], [], []>} : vector<3x8xf32>, vector<8x16xf32>, vector<3x16xf32> -> vector<3x16xf32>
    %c0_71 = arith.constant 0 : index
    %c0_72 = arith.constant 0 : index
    %c128 = arith.constant 128 : index
    %77 = vector.load %arg8[%c0_71, %c0_72, %c128] : memref<1x3x256xf32, #tpu.memory_space<vmem>>, vector<1x3x16xf32>
    %78 = vector.shape_cast %77 : vector<1x3x16xf32> to vector<3x16xf32>
    %79 = arith.addf %78, %76 : vector<3x16xf32>
    %c0_73 = arith.constant 0 : index
    %c0_74 = arith.constant 0 : index
    %c128_75 = arith.constant 128 : index
    %80 = vector.load %arg8[%c0_73, %c0_74, %c128_75] : memref<1x3x256xf32, #tpu.memory_space<vmem>>, vector<1x3x16xf32>
    %81 = vector.shape_cast %80 : vector<1x3x16xf32> to vector<3x16xf32>
    %82 = vector.shape_cast %79 : vector<3x16xf32> to vector<1x3x16xf32>
    tpu.vector_store %arg8[%c0_73, %c0_74, %c128_75], %82 {strides = array<i32>} : memref<1x3x256xf32, #tpu.memory_space<vmem>>, vector<1x3x16xf32>,
    %c0_76 = arith.constant 0 : index
    %c0_77 = arith.constant 0 : index
    %c144 = arith.constant 144 : index
    %83 = vector.load %arg8[%c0_76, %c0_77, %c144] : memref<1x3x256xf32, #tpu.memory_space<vmem>>, vector<1x3x16xf32>
    %84 = vector.shape_cast %83 : vector<1x3x16xf32> to vector<3x16xf32>
    %85 = arith.addf %84, %76 : vector<3x16xf32>
    %c0_78 = arith.constant 0 : index
    %c0_79 = arith.constant 0 : index
    %c144_80 = arith.constant 144 : index
    %86 = vector.load %arg8[%c0_78, %c0_79, %c144_80] : memref<1x3x256xf32, #tpu.memory_space<vmem>>, vector<1x3x16xf32>
    %87 = vector.shape_cast %86 : vector<1x3x16xf32> to vector<3x16xf32>
    %88 = vector.shape_cast %85 : vector<3x16xf32> to vector<1x3x16xf32>
    tpu.vector_store %arg8[%c0_78, %c0_79, %c144_80], %88 {strides = array<i32>} : memref<1x3x256xf32, #tpu.memory_space<vmem>>, vector<1x3x16xf32>,
    %89 = vector.extract_strided_slice %13 {offsets = [0, 40], sizes = [3, 8], strides = [1, 1]} : vector<3x64xf32> to vector<3x8xf32>
    %c0_81 = arith.constant 0 : index
    %c0_82 = arith.constant 0 : index
    %90 = vector.load %arg6[%c0_81, %c0_82] : memref<8x16xf32, #tpu.memory_space<vmem>>, vector<8x16xf32>
    %cst_83 = arith.constant dense<0.000000e+00> : vector<3x16xf32>
    %91 = tpu.matmul %89, %90, %cst_83 {dimension_numbers = #tpu.dot_dimension_numbers<[1], [0], [0], [1], [0, 0, 1, 1], [], []>} : vector<3x8xf32>, vector<8x16xf32>, vector<3x16xf32> -> vector<3x16xf32>
    %c0_84 = arith.constant 0 : index
    %c0_85 = arith.constant 0 : index
    %c160 = arith.constant 160 : index
    %92 = vector.load %arg8[%c0_84, %c0_85, %c160] : memref<1x3x256xf32, #tpu.memory_space<vmem>>, vector<1x3x16xf32>
    %93 = vector.shape_cast %92 : vector<1x3x16xf32> to vector<3x16xf32>
    %94 = arith.addf %93, %91 : vector<3x16xf32>
    %c0_86 = arith.constant 0 : index
    %c0_87 = arith.constant 0 : index
    %c160_88 = arith.constant 160 : index
    %95 = vector.load %arg8[%c0_86, %c0_87, %c160_88] : memref<1x3x256xf32, #tpu.memory_space<vmem>>, vector<1x3x16xf32>
    %96 = vector.shape_cast %95 : vector<1x3x16xf32> to vector<3x16xf32>
    %97 = vector.shape_cast %94 : vector<3x16xf32> to vector<1x3x16xf32>
    tpu.vector_store %arg8[%c0_86, %c0_87, %c160_88], %97 {strides = array<i32>} : memref<1x3x256xf32, #tpu.memory_space<vmem>>, vector<1x3x16xf32>,
    %c0_89 = arith.constant 0 : index
    %c0_90 = arith.constant 0 : index
    %c176 = arith.constant 176 : index
    %98 = vector.load %arg8[%c0_89, %c0_90, %c176] : memref<1x3x256xf32, #tpu.memory_space<vmem>>, vector<1x3x16xf32>
    %99 = vector.shape_cast %98 : vector<1x3x16xf32> to vector<3x16xf32>
    %100 = arith.addf %99, %91 : vector<3x16xf32>
    %c0_91 = arith.constant 0 : index
    %c0_92 = arith.constant 0 : index
    %c176_93 = arith.constant 176 : index
    %101 = vector.load %arg8[%c0_91, %c0_92, %c176_93] : memref<1x3x256xf32, #tpu.memory_space<vmem>>, vector<1x3x16xf32>
    %102 = vector.shape_cast %101 : vector<1x3x16xf32> to vector<3x16xf32>
    %103 = vector.shape_cast %100 : vector<3x16xf32> to vector<1x3x16xf32>
    tpu.vector_store %arg8[%c0_91, %c0_92, %c176_93], %103 {strides = array<i32>} : memref<1x3x256xf32, #tpu.memory_space<vmem>>, vector<1x3x16xf32>,
    %104 = vector.extract_strided_slice %13 {offsets = [0, 48], sizes = [3, 8], strides = [1, 1]} : vector<3x64xf32> to vector<3x8xf32>
    %c0_94 = arith.constant 0 : index
    %c0_95 = arith.constant 0 : index
    %105 = vector.load %arg6[%c0_94, %c0_95] : memref<8x16xf32, #tpu.memory_space<vmem>>, vector<8x16xf32>
    %cst_96 = arith.constant dense<0.000000e+00> : vector<3x16xf32>
    %106 = tpu.matmul %104, %105, %cst_96 {dimension_numbers = #tpu.dot_dimension_numbers<[1], [0], [0], [1], [0, 0, 1, 1], [], []>} : vector<3x8xf32>, vector<8x16xf32>, vector<3x16xf32> -> vector<3x16xf32>
    %c0_97 = arith.constant 0 : index
    %c0_98 = arith.constant 0 : index
    %c192 = arith.constant 192 : index
    %107 = vector.load %arg8[%c0_97, %c0_98, %c192] : memref<1x3x256xf32, #tpu.memory_space<vmem>>, vector<1x3x16xf32>
    %108 = vector.shape_cast %107 : vector<1x3x16xf32> to vector<3x16xf32>
    %109 = arith.addf %108, %106 : vector<3x16xf32>
    %c0_99 = arith.constant 0 : index
    %c0_100 = arith.constant 0 : index
    %c192_101 = arith.constant 192 : index
    %110 = vector.load %arg8[%c0_99, %c0_100, %c192_101] : memref<1x3x256xf32, #tpu.memory_space<vmem>>, vector<1x3x16xf32>
    %111 = vector.shape_cast %110 : vector<1x3x16xf32> to vector<3x16xf32>
    %112 = vector.shape_cast %109 : vector<3x16xf32> to vector<1x3x16xf32>
    tpu.vector_store %arg8[%c0_99, %c0_100, %c192_101], %112 {strides = array<i32>} : memref<1x3x256xf32, #tpu.memory_space<vmem>>, vector<1x3x16xf32>,
    %c0_102 = arith.constant 0 : index
    %c0_103 = arith.constant 0 : index
    %c208 = arith.constant 208 : index
    %113 = vector.load %arg8[%c0_102, %c0_103, %c208] : memref<1x3x256xf32, #tpu.memory_space<vmem>>, vector<1x3x16xf32>
    %114 = vector.shape_cast %113 : vector<1x3x16xf32> to vector<3x16xf32>
    %115 = arith.addf %114, %106 : vector<3x16xf32>
    %c0_104 = arith.constant 0 : index
    %c0_105 = arith.constant 0 : index
    %c208_106 = arith.constant 208 : index
    %116 = vector.load %arg8[%c0_104, %c0_105, %c208_106] : memref<1x3x256xf32, #tpu.memory_space<vmem>>, vector<1x3x16xf32>
    %117 = vector.shape_cast %116 : vector<1x3x16xf32> to vector<3x16xf32>
    %118 = vector.shape_cast %115 : vector<3x16xf32> to vector<1x3x16xf32>
    tpu.vector_store %arg8[%c0_104, %c0_105, %c208_106], %118 {strides = array<i32>} : memref<1x3x256xf32, #tpu.memory_space<vmem>>, vector<1x3x16xf32>,
    %119 = vector.extract_strided_slice %13 {offsets = [0, 56], sizes = [3, 8], strides = [1, 1]} : vector<3x64xf32> to vector<3x8xf32>
    %c0_107 = arith.constant 0 : index
    %c0_108 = arith.constant 0 : index
    %120 = vector.load %arg6[%c0_107, %c0_108] : memref<8x16xf32, #tpu.memory_space<vmem>>, vector<8x16xf32>
    %cst_109 = arith.constant dense<0.000000e+00> : vector<3x16xf32>
    %121 = tpu.matmul %119, %120, %cst_109 {dimension_numbers = #tpu.dot_dimension_numbers<[1], [0], [0], [1], [0, 0, 1, 1], [], []>} : vector<3x8xf32>, vector<8x16xf32>, vector<3x16xf32> -> vector<3x16xf32>
    %c0_110 = arith.constant 0 : index
    %c0_111 = arith.constant 0 : index
    %c224 = arith.constant 224 : index
    %122 = vector.load %arg8[%c0_110, %c0_111, %c224] : memref<1x3x256xf32, #tpu.memory_space<vmem>>, vector<1x3x16xf32>
    %123 = vector.shape_cast %122 : vector<1x3x16xf32> to vector<3x16xf32>
    %124 = arith.addf %123, %121 : vector<3x16xf32>
    %c0_112 = arith.constant 0 : index
    %c0_113 = arith.constant 0 : index
    %c224_114 = arith.constant 224 : index
    %125 = vector.load %arg8[%c0_112, %c0_113, %c224_114] : memref<1x3x256xf32, #tpu.memory_space<vmem>>, vector<1x3x16xf32>
    %126 = vector.shape_cast %125 : vector<1x3x16xf32> to vector<3x16xf32>
    %127 = vector.shape_cast %124 : vector<3x16xf32> to vector<1x3x16xf32>
    tpu.vector_store %arg8[%c0_112, %c0_113, %c224_114], %127 {strides = array<i32>} : memref<1x3x256xf32, #tpu.memory_space<vmem>>, vector<1x3x16xf32>,
    %c0_115 = arith.constant 0 : index
    %c0_116 = arith.constant 0 : index
    %c240 = arith.constant 240 : index
    %128 = vector.load %arg8[%c0_115, %c0_116, %c240] : memref<1x3x256xf32, #tpu.memory_space<vmem>>, vector<1x3x16xf32>
    %129 = vector.shape_cast %128 : vector<1x3x16xf32> to vector<3x16xf32>
    %130 = arith.addf %129, %121 : vector<3x16xf32>
    %c0_117 = arith.constant 0 : index
    %c0_118 = arith.constant 0 : index
    %c240_119 = arith.constant 240 : index
    %131 = vector.load %arg8[%c0_117, %c0_118, %c240_119] : memref<1x3x256xf32, #tpu.memory_space<vmem>>, vector<1x3x16xf32>
    %132 = vector.shape_cast %131 : vector<1x3x16xf32> to vector<3x16xf32>
    %133 = vector.shape_cast %130 : vector<3x16xf32> to vector<1x3x16xf32>
    tpu.vector_store %arg8[%c0_117, %c0_118, %c240_119], %133 {strides = array<i32>} : memref<1x3x256xf32, #tpu.memory_space<vmem>>, vector<1x3x16xf32>,
    return
  }
  func.func @transform_0(%arg0: i32, %arg1: i32) -> (i32, i32, i32) {
    %c0_i32 = arith.constant 0 : i32
    %c0_i32_0 = arith.constant 0 : i32
    return %arg0, %c0_i32, %arg1 : i32, i32, i32
  }
  func.func @transform_1(%arg0: i32, %arg1: i32) -> (i32, i32, i32) {
    %c0_i32 = arith.constant 0 : i32
    %c0_i32_0 = arith.constant 0 : i32
    return %arg0, %c0_i32, %arg1 : i32, i32, i32
  }
  func.func @transform_2(%arg0: i32, %arg1: i32) -> (i32, i32) {
    %c0_i32 = arith.constant 0 : i32
    %c0_i32_0 = arith.constant 0 : i32
    %c0_i32_1 = arith.constant 0 : i32
    return %c0_i32, %c0_i32_0 : i32, i32
  }
  func.func @transform_3(%arg0: i32, %arg1: i32) -> (i32, i32) {
    %c0_i32 = arith.constant 0 : i32
    %c0_i32_0 = arith.constant 0 : i32
    %c0_i32_1 = arith.constant 0 : i32
    return %c0_i32, %c0_i32_0 : i32, i32
  }
  func.func @transform_4(%arg0: i32, %arg1: i32) -> (i32, i32) {
    %c0_i32 = arith.constant 0 : i32
    %c0_i32_0 = arith.constant 0 : i32
    %c0_i32_1 = arith.constant 0 : i32
    return %c0_i32, %c0_i32_0 : i32, i32
  }
  func.func @transform_5(%arg0: i32, %arg1: i32) -> (i32, i32) {
    %c0_i32 = arith.constant 0 : i32
    %c0_i32_0 = arith.constant 0 : i32
    %c0_i32_1 = arith.constant 0 : i32
    return %c0_i32, %c0_i32_0 : i32, i32
  }
  func.func @transform_6(%arg0: i32, %arg1: i32) -> (i32, i32, i32) {
    %c0_i32 = arith.constant 0 : i32
    %c0_i32_0 = arith.constant 0 : i32
    return %arg0, %c0_i32, %arg1 : i32, i32, i32
  }
}

</mosaic_0001>

<llo_original>
// kernel: tpu_custom_call.1
$region0: #{tpu_custom_call.1}
  #allocation0 [shape = 'u32[]', space=smem, size = 0x4, offset = 0x4, fixed_abs, tag = 'smem constant byte address 0x4 - core index']
  #allocation1 [shape = 'u32[144,128]{1,0:T(1,128)}', space=vmem, size = 0x12000, scoped, tag = 'internal scratch']
  %s0 = inlined_call_operand.vmem [shape: f32[2,2,256], index: 0, kind: input, shape index: {}]
  %s1 = inlined_call_operand.vmem [shape: f32[2,2,64], index: 1, kind: input, shape index: {}]
  %s2 = inlined_call_operand.vmem [shape: f32[3,2], index: 2, kind: input, shape index: {}]
  %s3 = inlined_call_operand.vmem [shape: f32[3,2], index: 3, kind: input, shape index: {}]
  %s4 = inlined_call_operand.vmem [shape: f32[8,16], index: 4, kind: input, shape index: {}]
  %s5 = inlined_call_operand.vmem [shape: f32[3,1], index: 5, kind: input, shape index: {}]
  %s6 = inlined_call_operand.vmem [shape: f32[2,3,256], index: 6, kind: output, shape index: {}]
  %s7 = sld [smem:[#allocation0]]
  $region57: #{tpu_custom_call.1} parent=0
    _
  %s9 = ssub.s32 1, %s7
  %s10 = scalar_select 0, %s9, %s7
  loop: start=0, step=1, limit=4
  $region2: #{tpu_custom_call.1} parent=0 // loop_pre_header
    _
  $region3: #{tpu_custom_call.1} parent=0 // loop_header
    %s12 = sphi 0, %s16
    %p13 = scmp.ge.s32.totalorder %s12, 4
    %s19 = sphi 0, %s31
    %s20 = sphi 0, %s27
    %s21 = sphi 0, %s19
    %s22 = sphi 0, %s20
    %s23 = sphi 0, %s21
    %s24 = sphi 0, %s22
    %s36 = sphi 0, %s38
    %s39 = sphi 0, %s36
    %s40 = sphi 0, %s39
    %s56 = sphi 0, %s40
    %s64 = sphi 0, %s66
    %s67 = sphi 0, %s64
    %s68 = sphi 0, %s67
    %s84 = sphi 0, %s68
    %s88 = sphi 0, %s88
    %s90 = sphi 0, %s88
    %s91 = sphi 0, %s90
    %s105 = sphi 0, %s91
    %s109 = sphi 0, %s109
    %s111 = sphi 0, %s109
    %s112 = sphi 0, %s111
    %s126 = sphi 0, %s112
    %s130 = sphi 0, %s130
    %s132 = sphi 0, %s130
    %s133 = sphi 0, %s132
    %s147 = sphi 0, %s133
    %s151 = sphi 0, %s151
    %s153 = sphi 0, %s151
    %s154 = sphi 0, %s153
    %s168 = sphi 0, %s154
    %s176 = sphi 0, %s178
    %s179 = sphi 0, %s176
    %s180 = sphi 0, %s179
    %s196 = sphi 0, %s180
  $region4: #{tpu_custom_call.1} parent=0 // loop_header_branch
    %15 = sbr.rel (%p13) target = $region8
  $region5: #{tpu_custom_call.1} parent=0 // loop_body
    %s17 = ssub.s32 %s12, 1
    %s18 = ssub.s32 %s12, 2
    %s25 = sadd.s32 1, %s20
    %p26 = scmp.ge.s32.totalorder %s25, 1
    %s27 = scalar_select %p26, 0, %s25
    %s28 = sadd.s32 1, %s19
    %s29 = scalar_select %p26, %s28, %s19
    %p30 = scmp.ge.s32.totalorder %s29, 2
    %s31 = scalar_select %p30, 0, %s29
    %s32 = ssub.s32 %s19, %s31
    %s33 = ssub.s32 %s20, %s27
    %s34 = sor.u32 %s32, %s33
    %p35 = scmp.eq.s32.totalorder %s34, 0
    %s37 = sadd.s32 %s36, 1
    %s38 = scalar_select %p35, %s36, %s37
    %p41 = pneg %p35
    %p42 = scmp.eq.s32.totalorder %s12, 1
    %p43 = por %p41, %p42
    %p44 = scmp.ne.s32.totalorder %s36, %s39
    %p45 = scmp.eq.s32.totalorder %s12, 0
    %p46 = por %p44, %p45
    %p47 = scmp.ne.s32.totalorder %s36, %s39
    %p48 = scmp.eq.s32.totalorder %s17, 1
    %p49 = por %p47, %p48
    %p50 = scmp.ne.s32.totalorder %s39, %s40
    %p51 = scmp.eq.s32.totalorder %s17, 0
    %p52 = por %p50, %p51
    %p53 = scmp.ne.s32.totalorder %s39, %s40
    %p54 = scmp.eq.s32.totalorder %s18, 1
    %p55 = por %p53, %p54
    %p57 = scmp.ne.s32.totalorder %s40, %s56
    %p58 = scmp.eq.s32.totalorder %s18, 0
    %p59 = por %p57, %p58
    %s60 = ssub.s32 %s19, %s31
    %s61 = ssub.s32 %s20, %s27
    %s62 = sor.u32 %s60, %s61
    %p63 = scmp.eq.s32.totalorder %s62, 0
    %s65 = sadd.s32 %s64, 1
    %s66 = scalar_select %p63, %s64, %s65
    %p69 = pneg %p63
    %p70 = scmp.eq.s32.totalorder %s12, 1
    %p71 = por %p69, %p70
    %p72 = scmp.ne.s32.totalorder %s64, %s67
    %p73 = scmp.eq.s32.totalorder %s12, 0
    %p74 = por %p72, %p73
    %p75 = scmp.ne.s32.totalorder %s64, %s67
    %p76 = scmp.eq.s32.totalorder %s17, 1
    %p77 = por %p75, %p76
    %p78 = scmp.ne.s32.totalorder %s67, %s68
    %p79 = scmp.eq.s32.totalorder %s17, 0
    %p80 = por %p78, %p79
    %p81 = scmp.ne.s32.totalorder %s67, %s68
    %p82 = scmp.eq.s32.totalorder %s18, 1
    %p83 = por %p81, %p82
    %p85 = scmp.ne.s32.totalorder %s68, %s84
    %p86 = scmp.eq.s32.totalorder %s18, 0
    %p87 = por %p85, %p86
    %s89 = sadd.s32 %s88, 1
    %p92 = scmp.eq.s32.totalorder %s12, 1
    %p93 = scmp.ne.s32.totalorder %s88, %s90
    %p94 = scmp.eq.s32.totalorder %s12, 0
    %p95 = por %p93, %p94
    %p96 = scmp.ne.s32.totalorder %s88, %s90
    %p97 = scmp.eq.s32.totalorder %s17, 1
    %p98 = por %p96, %p97
    %p99 = scmp.ne.s32.totalorder %s90, %s91
    %p100 = scmp.eq.s32.totalorder %s17, 0
    %p101 = por %p99, %p100
    %p102 = scmp.ne.s32.totalorder %s90, %s91
    %p103 = scmp.eq.s32.totalorder %s18, 1
    %p104 = por %p102, %p103
    %p106 = scmp.ne.s32.totalorder %s91, %s105
    %p107 = scmp.eq.s32.totalorder %s18, 0
    %p108 = por %p106, %p107
    %s110 = sadd.s32 %s109, 1
    %p113 = scmp.eq.s32.totalorder %s12, 1
    %p114 = scmp.ne.s32.totalorder %s109, %s111
    %p115 = scmp.eq.s32.totalorder %s12, 0
    %p116 = por %p114, %p115
    %p117 = scmp.ne.s32.totalorder %s109, %s111
    %p118 = scmp.eq.s32.totalorder %s17, 1
    %p119 = por %p117, %p118
    %p120 = scmp.ne.s32.totalorder %s111, %s112
    %p121 = scmp.eq.s32.totalorder %s17, 0
    %p122 = por %p120, %p121
    %p123 = scmp.ne.s32.totalorder %s111, %s112
    %p124 = scmp.eq.s32.totalorder %s18, 1
    %p125 = por %p123, %p124
    %p127 = scmp.ne.s32.totalorder %s112, %s126
    %p128 = scmp.eq.s32.totalorder %s18, 0
    %p129 = por %p127, %p128
    %s131 = sadd.s32 %s130, 1
    %p134 = scmp.eq.s32.totalorder %s12, 1
    %p135 = scmp.ne.s32.totalorder %s130, %s132
    %p136 = scmp.eq.s32.totalorder %s12, 0
    %p137 = por %p135, %p136
    %p138 = scmp.ne.s32.totalorder %s130, %s132
    %p139 = scmp.eq.s32.totalorder %s17, 1
    %p140 = por %p138, %p139
    %p141 = scmp.ne.s32.totalorder %s132, %s133
    %p142 = scmp.eq.s32.totalorder %s17, 0
    %p143 = por %p141, %p142
    %p144 = scmp.ne.s32.totalorder %s132, %s133
    %p145 = scmp.eq.s32.totalorder %s18, 1
    %p146 = por %p144, %p145
    %p148 = scmp.ne.s32.totalorder %s133, %s147
    %p149 = scmp.eq.s32.totalorder %s18, 0
    %p150 = por %p148, %p149
    %s152 = sadd.s32 %s151, 1
    %p155 = scmp.eq.s32.totalorder %s12, 1
    %p156 = scmp.ne.s32.totalorder %s151, %s153
    %p157 = scmp.eq.s32.totalorder %s12, 0
    %p158 = por %p156, %p157
    %p159 = scmp.ne.s32.totalorder %s151, %s153
    %p160 = scmp.eq.s32.totalorder %s17, 1
    %p161 = por %p159, %p160
    %p162 = scmp.ne.s32.totalorder %s153, %s154
    %p163 = scmp.eq.s32.totalorder %s17, 0
    %p164 = por %p162, %p163
    %p165 = scmp.ne.s32.totalorder %s153, %s154
    %p166 = scmp.eq.s32.totalorder %s18, 1
    %p167 = por %p165, %p166
    %p169 = scmp.ne.s32.totalorder %s154, %s168
    %p170 = scmp.eq.s32.totalorder %s18, 0
    %p171 = por %p169, %p170
    %s172 = ssub.s32 %s19, %s31
    %s173 = ssub.s32 %s20, %s27
    %s174 = sor.u32 %s172, %s173
    %p175 = scmp.eq.s32.totalorder %s174, 0
    %s177 = sadd.s32 %s176, 1
    %s178 = scalar_select %p175, %s176, %s177
    %p181 = pneg %p175
    %p182 = scmp.eq.s32.totalorder %s12, 1
    %p183 = por %p181, %p182
    %p184 = scmp.ne.s32.totalorder %s176, %s179
    %p185 = scmp.eq.s32.totalorder %s12, 0
    %p186 = por %p184, %p185
    %p187 = scmp.ne.s32.totalorder %s176, %s179
    %p188 = scmp.eq.s32.totalorder %s17, 1
    %p189 = por %p187, %p188
    %p190 = scmp.ne.s32.totalorder %s179, %s180
    %p191 = scmp.eq.s32.totalorder %s17, 0
    %p192 = por %p190, %p191
    %p193 = scmp.ne.s32.totalorder %s179, %s180
    %p194 = scmp.eq.s32.totalorder %s18, 1
    %p195 = por %p193, %p194
    %p197 = scmp.ne.s32.totalorder %s180, %s196
    %p198 = scmp.eq.s32.totalorder %s18, 0
    %p199 = por %p197, %p198
    %p200 = scmp.le.s32.totalorder 1, %s12
    %p201 = scmp.lt.s32.totalorder %s12, 3
    %p202 = pnand %p200, %p201
    %p203 = pneg %p202
    // Predicated region
    $region9: #{tpu_custom_call.1} parent=5 // pred_check
      _
    $region10: #{tpu_custom_call.1} parent=5 // pred_check_branch
      %205 = sbr.rel (%p202) target = $region12
    $region11: #{tpu_custom_call.1} parent=5 // pred_region
      %s206 = ssub.s32 %s12, 1
      // Predicated region
      $region13: #{tpu_custom_call.1} parent=11 // pred_check
        %p207 = pneg %p101
      $region14: #{tpu_custom_call.1} parent=11 // pred_check_branch
        %209 = sbr.rel (%p207) target = $region16
      $region15: #{tpu_custom_call.1} parent=11 // pred_region
        _
      $region16: #{tpu_custom_call.1} parent=11 // pred_fallthru
        _
      // Predicated region
      $region17: #{tpu_custom_call.1} parent=11 // pred_check
        %p210 = pneg %p122
      $region18: #{tpu_custom_call.1} parent=11 // pred_check_branch
        %212 = sbr.rel (%p210) target = $region20
      $region19: #{tpu_custom_call.1} parent=11 // pred_region
        _
      $region20: #{tpu_custom_call.1} parent=11 // pred_fallthru
        _
      // Predicated region
      $region21: #{tpu_custom_call.1} parent=11 // pred_check
        %p213 = pneg %p143
      $region22: #{tpu_custom_call.1} parent=11 // pred_check_branch
        %215 = sbr.rel (%p213) target = $region24
      $region23: #{tpu_custom_call.1} parent=11 // pred_region
        _
      $region24: #{tpu_custom_call.1} parent=11 // pred_fallthru
        _
      // Predicated region
      $region25: #{tpu_custom_call.1} parent=11 // pred_check
        %p216 = pneg %p164
      $region26: #{tpu_custom_call.1} parent=11 // pred_check_branch
        %218 = sbr.rel (%p216) target = $region28
      $region27: #{tpu_custom_call.1} parent=11 // pred_region
        _
      $region28: #{tpu_custom_call.1} parent=11 // pred_fallthru
        _
    $region12: #{tpu_custom_call.1} parent=5 // pred_fallthru
      _
    %p219 = scmp.lt.s32.totalorder %s12, 2
    // Predicated region
    $region29: #{tpu_custom_call.1} parent=5 // pred_check
      %p220 = pneg %p219
    $region30: #{tpu_custom_call.1} parent=5 // pred_check_branch
      %222 = sbr.rel (%p220) target = $region32
    $region31: #{tpu_custom_call.1} parent=5 // pred_region
      // Predicated region
      $region33: #{tpu_custom_call.1} parent=31 // pred_check
        %p223 = pneg %p46
      $region34: #{tpu_custom_call.1} parent=31 // pred_check_branch
        %225 = sbr.rel (%p223) target = $region36
      $region35: #{tpu_custom_call.1} parent=31 // pred_region
        %s226 = smul.u32 2, %s20
        %p227 = scmp.lt.s32.totalorder %s19, 1
        %s228 = scalar_select %p227, %s19, 1
        %p229 = scmp.lt.s32.totalorder %s226, 1
        %s230 = scalar_select %p229, %s226, 1
        %s231 = smul.addr %s228, 2
        %s232 = sadd.s32 %s230, %s231
        %s233 = smul.addr %s232, 2
        %s234 = scalar_lea.vmem %s0, %s233
        %s235 = smul.u32 2, %s20
      $region36: #{tpu_custom_call.1} parent=31 // pred_fallthru
        _
      // Predicated region
      $region37: #{tpu_custom_call.1} parent=31 // pred_check
        %p236 = pneg %p74
      $region38: #{tpu_custom_call.1} parent=31 // pred_check_branch
        %238 = sbr.rel (%p236) target = $region40
      $region39: #{tpu_custom_call.1} parent=31 // pred_region
        %p239 = scmp.lt.s32.totalorder %s19, 1
        %s240 = scalar_select %p239, %s19, 1
        %p241 = scmp.lt.s32.totalorder %s20, 0
        %s242 = scalar_select %p241, %s20, 0
        %s243 = sadd.s32 %s242, %s240
        %s244 = smul.addr %s243, 2
        %s245 = scalar_lea.vmem %s1, %s244
      $region40: #{tpu_custom_call.1} parent=31 // pred_fallthru
        _
    $region32: #{tpu_custom_call.1} parent=5 // pred_fallthru
      _
    %p246 = scmp.le.s32.totalorder 1, %s12
    %p247 = scmp.lt.s32.totalorder %s12, 3
    %p248 = pnand %p246, %p247
    %p249 = pneg %p248
    // Predicated region
    $region41: #{tpu_custom_call.1} parent=5 // pred_check
      _
    $region42: #{tpu_custom_call.1} parent=5 // pred_check_branch
      %251 = sbr.rel (%p248) target = $region44
    $region43: #{tpu_custom_call.1} parent=5 // pred_region
      %s252 = ssub.s32 %s12, 1
      %s253 = smul.u32 2, %s22
      %p254 = scmp.lt.s32.totalorder %s21, 1
      %s255 = scalar_select %p254, %s21, 1
      %p256 = scmp.lt.s32.totalorder %s253, 1
      %s257 = scalar_select %p256, %s253, 1
      %s258 = smul.addr %s255, 2
      %s259 = sadd.s32 %s257, %s258
      %s260 = smul.addr %s259, 2
      %s261 = scalar_lea.vmem %s0, %s260
      %p262 = pneg %p52
      %p263 = pneg %p49
      %p264 = scmp.lt.s32.totalorder %s21, 1
      %s265 = scalar_select %p264, %s21, 1
      %p266 = scmp.lt.s32.totalorder %s22, 0
      %s267 = scalar_select %p266, %s22, 0
      %s268 = sadd.s32 %s267, %s265
      %s269 = smul.addr %s268, 2
      %s270 = scalar_lea.vmem %s1, %s269
      %p271 = pneg %p80
      %p272 = pneg %p77
      %p273 = pneg %p101
      %p274 = pneg %p98
      %p275 = pneg %p122
      %p276 = pneg %p119
      %p277 = pneg %p143
      %p278 = pneg %p140
      %p279 = pneg %p164
      %p280 = pneg %p161
      %p281 = pneg %p192
      %p282 = pneg %p189
      %s283 = smul.u32 2, %s22
      %p284 = scmp.lt.s32.totalorder %s21, 1
      %s285 = scalar_select %p284, %s21, 1
      %p286 = scmp.lt.s32.totalorder %s283, 1
      %s287 = scalar_select %p286, %s283, 1
      %s288 = smul.addr %s285, 2
      %s289 = sadd.s32 %s287, %s288
      %s290 = smul.addr %s289, 4
      %s291 = scalar_lea.vmem %s6, %s290
      %s292 = smul.u32 2, %s22
      %p293 = scmp.lt.s32.totalorder %s21, 1
      %s294 = scalar_select %p293, %s21, 1
      %p295 = scmp.lt.s32.totalorder %s292, 1
      %s296 = scalar_select %p295, %s292, 1
      %s297 = smul.addr %s294, 2
      %s298 = sadd.s32 %s296, %s297
      %s299 = smul.addr %s298, 2
      %s300 = scalar_lea.vmem %s0, %s299
      %s301 = smul.u32 2, %s22
      %p302 = scmp.lt.s32.totalorder %s21, 1
      %s303 = scalar_select %p302, %s21, 1
      %p304 = scmp.lt.s32.totalorder %s22, 0
      %s305 = scalar_select %p304, %s22, 0
      %s306 = sadd.s32 %s305, %s303
      %s307 = smul.addr %s306, 2
      %s308 = scalar_lea.vmem %s1, %s307
      %s309 = smul.u32 2, %s22
      %p310 = scmp.lt.s32.totalorder %s21, 1
      %s311 = scalar_select %p310, %s21, 1
      %p312 = scmp.lt.s32.totalorder %s309, 1
      %s313 = scalar_select %p312, %s309, 1
      %s314 = smul.addr %s311, 2
      %s315 = sadd.s32 %s313, %s314
      %s316 = smul.addr %s315, 4
      %s317 = scalar_lea.vmem %s6, %s316
      %s318 = smul.u32 2, %s22
      %v319 = vld [vmem:[%s2] sm:$0x7]
      %v320 = vld [vmem:[%s300] sm:$0xf]
      %v321 = vld [vmem:[%s5] sm:$0x7]
      %323 = vset.pattern.permute.xlu0 0
      %324 = vperm.xlu0 %323, %v321
      %v325 = vpop.permute.xlu0 %324
      %v329 = vunpack.c.l.s4 1983009808
      %v330 = vunpack.c.0.s8 %v329
      %v331 = vlaneseq
      %v332 = vshrl.u32 %v331, 7
      %v333 = vsub.s32 %v330, %v332
      %v334 = vrot.slane %v320, %v333
      %v335 = vcombine.high %v334, %v334
      %vm336 = vcmask 15360
      %v338 = vsel %vm336, %v319, 0
      %vm340 = vcmask 1041408
      %v341 = vsel %vm340, %v334, 0
      %v343 = vsel %vm340, %v335, 0
      %345 = vmatprep.subr.mxu0 %v343
      %346 = vmatpush1.msra.mxu0 %v341
      %347 = vmatprep.subr.mxu0 0.0
      %348 = vmatpush1.msra.mxu0 0.0
      %349 = vmatprep.subr.mxu0 0.0
      %350 = vmatpush1.msra.mxu0 0.0
      %351 = vmatprep.subr.mxu0 0.0
      %352 = vmatpush1.msra.mxu0 0.0
      %353 = vmatprep.subr.mxu0 0.0
      %354 = vmatpush1.msra.mxu0 0.0
      %355 = vmatprep.subr.mxu0 0.0
      %356 = vmatpush1.msra.mxu0 0.0
      %357 = vmatprep.subr.mxu0 0.0
      %358 = vmatpush1.msra.mxu0 0.0
      %359 = vmatprep.subr.mxu0 0.0
      %360 = vmatpush1.msra.mxu0 0.0
      %361 = vmatprep.subr.mxu0 0.0
      %362 = vmatpush1.msra.mxu0 0.0
      %363 = vmatprep.subr.mxu0 0.0
      %364 = vmatpush1.msra.mxu0 0.0
      %365 = vmatprep.subr.mxu0 0.0
      %366 = vmatpush1.msra.mxu0 0.0
      %367 = vmatprep.subr.mxu0 0.0
      %368 = vmatpush1.msra.mxu0 0.0
      %369 = vmatprep.subr.mxu0 0.0
      %370 = vmatpush1.msra.mxu0 0.0
      %371 = vmatprep.subr.mxu0 0.0
      %372 = vmatpush1.msra.mxu0 0.0
      %373 = vmatprep.subr.mxu0 0.0
      %374 = vmatpush1.msra.mxu0 0.0
      %375 = vmatprep.subr.mxu0 0.0
      %376 = vmatpush1.msra.mxu0 0.0
      %377 = vmatprep.subr.mxu0 0.0
      %378 = vmatpush1.msra.mxu0 0.0
      %379 = vmatprep.subr.mxu0 0.0
      %380 = vmatpush1.msra.mxu0 0.0
      %381 = vmatprep.subr.mxu0 0.0
      %382 = vmatpush1.msra.mxu0 0.0
      %383 = vmatprep.subr.mxu0 0.0
      %384 = vmatpush1.msra.mxu0 0.0
      %385 = vmatprep.subr.mxu0 0.0
      %386 = vmatpush1.msra.mxu0 0.0
      %387 = vmatprep.subr.mxu0 0.0
      %388 = vmatpush1.msra.mxu0 0.0
      %389 = vmatprep.subr.mxu0 0.0
      %390 = vmatpush1.msra.mxu0 0.0
      %391 = vmatprep.subr.mxu0 0.0
      %392 = vmatpush1.msra.mxu0 0.0
      %393 = vmatprep.subr.mxu0 0.0
      %394 = vmatpush1.msra.mxu0 0.0
      %395 = vmatprep.subr.mxu0 0.0
      %396 = vmatpush1.msra.mxu0 0.0
      %397 = vmatprep.subr.mxu0 0.0
      %398 = vmatpush1.msra.mxu0 0.0
      %399 = vmatprep.subr.mxu0 0.0
      %400 = vmatpush1.msra.mxu0 0.0
      %401 = vmatprep.subr.mxu0 0.0
      %402 = vmatpush1.msra.mxu0 0.0
      %403 = vmatprep.subr.mxu0 0.0
      %404 = vmatpush1.msra.mxu0 0.0
      %405 = vmatprep.subr.mxu0 0.0
      %406 = vmatpush1.msra.mxu0 0.0
      %407 = vmatprep.subr.mxu0 0.0
      %408 = vmatpush1.msra.mxu0 0.0
      %409 = vmatprep.mubr.f32.mxu0 0.0
      %410 = vmatmul.mubr.f32.gmra.mrb[0].mxu0 %v338
      %v411 = vpop.f32.mrb[0].mxu0
      %v412 = vadd.f32 %v325, %v411
      %v413 = vpop.f32.mrb[0].mxu0
      %v414 = vadd.f32 %v325, %v413
      %415 = vdwg.mxu0
      %v418 = vcombine.low %v412, %v414
      %420 = vst [vmem:[%s317] sm:$0x77] %v418
      %v421 = vld [vmem:[%s3] sm:$0x7]
      %v422 = vld [vmem:[%s308] sm:$0x3]
      %v424 = vsel %vm336, %v421, 0
      %v427 = vsel %vm340, %v422, 0
      %429 = vmatprep.subr.mxu0 0.0
      %430 = vmatpush1.msra.mxu0 %v427
      %431 = vmatprep.subr.mxu0 0.0
      %432 = vmatpush1.msra.mxu0 0.0
      %433 = vmatprep.subr.mxu0 0.0
      %434 = vmatpush1.msra.mxu0 0.0
      %435 = vmatprep.subr.mxu0 0.0
      %436 = vmatpush1.msra.mxu0 0.0
      %437 = vmatprep.subr.mxu0 0.0
      %438 = vmatpush1.msra.mxu0 0.0
      %439 = vmatprep.subr.mxu0 0.0
      %440 = vmatpush1.msra.mxu0 0.0
      %441 = vmatprep.subr.mxu0 0.0
      %442 = vmatpush1.msra.mxu0 0.0
      %443 = vmatprep.subr.mxu0 0.0
      %444 = vmatpush1.msra.mxu0 0.0
      %445 = vmatprep.subr.mxu0 0.0
      %446 = vmatpush1.msra.mxu0 0.0
      %447 = vmatprep.subr.mxu0 0.0
      %448 = vmatpush1.msra.mxu0 0.0
      %449 = vmatprep.subr.mxu0 0.0
      %450 = vmatpush1.msra.mxu0 0.0
      %451 = vmatprep.subr.mxu0 0.0
      %452 = vmatpush1.msra.mxu0 0.0
      %453 = vmatprep.subr.mxu0 0.0
      %454 = vmatpush1.msra.mxu0 0.0
      %455 = vmatprep.subr.mxu0 0.0
      %456 = vmatpush1.msra.mxu0 0.0
      %457 = vmatprep.subr.mxu0 0.0
      %458 = vmatpush1.msra.mxu0 0.0
      %459 = vmatprep.subr.mxu0 0.0
      %460 = vmatpush1.msra.mxu0 0.0
      %461 = vmatprep.subr.mxu0 0.0
      %462 = vmatpush1.msra.mxu0 0.0
      %463 = vmatprep.subr.mxu0 0.0
      %464 = vmatpush1.msra.mxu0 0.0
      %465 = vmatprep.subr.mxu0 0.0
      %466 = vmatpush1.msra.mxu0 0.0
      %467 = vmatprep.subr.mxu0 0.0
      %468 = vmatpush1.msra.mxu0 0.0
      %469 = vmatprep.subr.mxu0 0.0
      %470 = vmatpush1.msra.mxu0 0.0
      %471 = vmatprep.subr.mxu0 0.0
      %472 = vmatpush1.msra.mxu0 0.0
      %473 = vmatprep.subr.mxu0 0.0
      %474 = vmatpush1.msra.mxu0 0.0
      %475 = vmatprep.subr.mxu0 0.0
      %476 = vmatpush1.msra.mxu0 0.0
      %477 = vmatprep.subr.mxu0 0.0
      %478 = vmatpush1.msra.mxu0 0.0
      %479 = vmatprep.subr.mxu0 0.0
      %480 = vmatpush1.msra.mxu0 0.0
      %481 = vmatprep.subr.mxu0 0.0
      %482 = vmatpush1.msra.mxu0 0.0
      %483 = vmatprep.subr.mxu0 0.0
      %484 = vmatpush1.msra.mxu0 0.0
      %485 = vmatprep.subr.mxu0 0.0
      %486 = vmatpush1.msra.mxu0 0.0
      %487 = vmatprep.subr.mxu0 0.0
      %488 = vmatpush1.msra.mxu0 0.0
      %489 = vmatprep.subr.mxu0 0.0
      %490 = vmatpush1.msra.mxu0 0.0
      %491 = vmatprep.subr.mxu0 0.0
      %492 = vmatpush1.msra.mxu0 0.0
      %493 = vmatprep.mubr.f32.mxu0 0.0
      %494 = vmatmul.mubr.f32.gmra.mrb[0].mxu0 %v424
      %v495 = vpop.f32.mrb[0].mxu0
      %v496 = vadd.f32 0.0, %v495
      %v497 = vpop.f32.mrb[0].mxu0
      %498 = vdwg.mxu0
      %v499 = vld [vmem:[%s4] sm:$0xff]
      %vm500 = vcmask 64512
      %v502 = vsel %vm500, %v496, 0
      %504 = vmatprep.subr.mxu0 0.0
      %505 = vmatpush1.msra.mxu0 %v499
      %506 = vmatprep.subr.mxu0 0.0
      %507 = vmatpush1.msra.mxu0 0.0
      %508 = vmatprep.subr.mxu0 0.0
      %509 = vmatpush1.msra.mxu0 0.0
      %510 = vmatprep.subr.mxu0 0.0
      %511 = vmatpush1.msra.mxu0 0.0
      %512 = vmatprep.subr.mxu0 0.0
      %513 = vmatpush1.msra.mxu0 0.0
      %514 = vmatprep.subr.mxu0 0.0
      %515 = vmatpush1.msra.mxu0 0.0
      %516 = vmatprep.subr.mxu0 0.0
      %517 = vmatpush1.msra.mxu0 0.0
      %518 = vmatprep.subr.mxu0 0.0
      %519 = vmatpush1.msra.mxu0 0.0
      %520 = vmatprep.subr.mxu0 0.0
      %521 = vmatpush1.msra.mxu0 0.0
      %522 = vmatprep.subr.mxu0 0.0
      %523 = vmatpush1.msra.mxu0 0.0
      %524 = vmatprep.subr.mxu0 0.0
      %525 = vmatpush1.msra.mxu0 0.0
      %526 = vmatprep.subr.mxu0 0.0
      %527 = vmatpush1.msra.mxu0 0.0
      %528 = vmatprep.subr.mxu0 0.0
      %529 = vmatpush1.msra.mxu0 0.0
      %530 = vmatprep.subr.mxu0 0.0
      %531 = vmatpush1.msra.mxu0 0.0
      %532 = vmatprep.subr.mxu0 0.0
      %533 = vmatpush1.msra.mxu0 0.0
      %534 = vmatprep.subr.mxu0 0.0
      %535 = vmatpush1.msra.mxu0 0.0
      %536 = vmatprep.subr.mxu0 0.0
      %537 = vmatpush1.msra.mxu0 0.0
      %538 = vmatprep.subr.mxu0 0.0
      %539 = vmatpush1.msra.mxu0 0.0
      %540 = vmatprep.subr.mxu0 0.0
      %541 = vmatpush1.msra.mxu0 0.0
      %542 = vmatprep.subr.mxu0 0.0
      %543 = vmatpush1.msra.mxu0 0.0
      %544 = vmatprep.subr.mxu0 0.0
      %545 = vmatpush1.msra.mxu0 0.0
      %546 = vmatprep.subr.mxu0 0.0
      %547 = vmatpush1.msra.mxu0 0.0
      %548 = vmatprep.subr.mxu0 0.0
      %549 = vmatpush1.msra.mxu0 0.0
      %550 = vmatprep.subr.mxu0 0.0
      %551 = vmatpush1.msra.mxu0 0.0
      %552 = vmatprep.subr.mxu0 0.0
      %553 = vmatpush1.msra.mxu0 0.0
      %554 = vmatprep.subr.mxu0 0.0
      %555 = vmatpush1.msra.mxu0 0.0
      %556 = vmatprep.subr.mxu0 0.0
      %557 = vmatpush1.msra.mxu0 0.0
      %558 = vmatprep.subr.mxu0 0.0
      %559 = vmatpush1.msra.mxu0 0.0
      %560 = vmatprep.subr.mxu0 0.0
      %561 = vmatpush1.msra.mxu0 0.0
      %562 = vmatprep.subr.mxu0 0.0
      %563 = vmatpush1.msra.mxu0 0.0
      %564 = vmatprep.subr.mxu0 0.0
      %565 = vmatpush1.msra.mxu0 0.0
      %566 = vmatprep.subr.mxu0 0.0
      %567 = vmatpush1.msra.mxu0 0.0
      %568 = vmatprep.mubr.f32.mxu0 0.0
      %569 = vmatmul.mubr.f32.gmra.mrb[0].mxu0 %v502
      %v570 = vpop.f32.mrb[0].mxu0
      %v571 = vadd.f32 0.0, %v570
      %v572 = vpop.f32.mrb[0].mxu0
      %573 = vdwg.mxu0
      %v574 = vld [vmem:[%s317] sm:$0x7]
      %v575 = vadd.f32 %v574, %v571
      %vm576 = vcmask 124928
      %577 = vst.msk [vmem:[%s317] sm:$0x7] %vm576, %v575
      %v578 = vld [vmem:[%s317] sm:$0x7]
      %580 = vrot.lane.b32.xlu0 %v571, 16
      %v581 = vpop.permute.xlu0 %580
      %v583 = vadd.f32 %v578, %v581
      %vm584 = vcmask 256128
      %585 = vst.msk [vmem:[%s317] sm:$0x7] %vm584, %v583
      %v586 = vld [vmem:[%s4] sm:$0xff]
      %587 = vrot.lane.b32.xlu0 %v496, 120
      %v588 = vpop.permute.xlu0 %587
      %v589 = vsel %vm500, %v588, 0
      %591 = vmatprep.subr.mxu0 0.0
      %592 = vmatpush1.msra.mxu0 %v586
      %593 = vmatprep.subr.mxu0 0.0
      %594 = vmatpush1.msra.mxu0 0.0
      %595 = vmatprep.subr.mxu0 0.0
      %596 = vmatpush1.msra.mxu0 0.0
      %597 = vmatprep.subr.mxu0 0.0
      %598 = vmatpush1.msra.mxu0 0.0
      %599 = vmatprep.subr.mxu0 0.0
      %600 = vmatpush1.msra.mxu0 0.0
      %601 = vmatprep.subr.mxu0 0.0
      %602 = vmatpush1.msra.mxu0 0.0
      %603 = vmatprep.subr.mxu0 0.0
      %604 = vmatpush1.msra.mxu0 0.0
      %605 = vmatprep.subr.mxu0 0.0
      %606 = vmatpush1.msra.mxu0 0.0
      %607 = vmatprep.subr.mxu0 0.0
      %608 = vmatpush1.msra.mxu0 0.0
      %609 = vmatprep.subr.mxu0 0.0
      %610 = vmatpush1.msra.mxu0 0.0
      %611 = vmatprep.subr.mxu0 0.0
      %612 = vmatpush1.msra.mxu0 0.0
      %613 = vmatprep.subr.mxu0 0.0
      %614 = vmatpush1.msra.mxu0 0.0
      %615 = vmatprep.subr.mxu0 0.0
      %616 = vmatpush1.msra.mxu0 0.0
      %617 = vmatprep.subr.mxu0 0.0
      %618 = vmatpush1.msra.mxu0 0.0
      %619 = vmatprep.subr.mxu0 0.0
      %620 = vmatpush1.msra.mxu0 0.0
      %621 = vmatprep.subr.mxu0 0.0
      %622 = vmatpush1.msra.mxu0 0.0
      %623 = vmatprep.subr.mxu0 0.0
      %624 = vmatpush1.msra.mxu0 0.0
      %625 = vmatprep.subr.mxu0 0.0
      %626 = vmatpush1.msra.mxu0 0.0
      %627 = vmatprep.subr.mxu0 0.0
      %628 = vmatpush1.msra.mxu0 0.0
      %629 = vmatprep.subr.mxu0 0.0
      %630 = vmatpush1.msra.mxu0 0.0
      %631 = vmatprep.subr.mxu0 0.0
      %632 = vmatpush1.msra.mxu0 0.0
      %633 = vmatprep.subr.mxu0 0.0
      %634 = vmatpush1.msra.mxu0 0.0
      %635 = vmatprep.subr.mxu0 0.0
      %636 = vmatpush1.msra.mxu0 0.0
      %637 = vmatprep.subr.mxu0 0.0
      %638 = vmatpush1.msra.mxu0 0.0
      %639 = vmatprep.subr.mxu0 0.0
      %640 = vmatpush1.msra.mxu0 0.0
      %641 = vmatprep.subr.mxu0 0.0
      %642 = vmatpush1.msra.mxu0 0.0
      %643 = vmatprep.subr.mxu0 0.0
      %644 = vmatpush1.msra.mxu0 0.0
      %645 = vmatprep.subr.mxu0 0.0
      %646 = vmatpush1.msra.mxu0 0.0
      %647 = vmatprep.subr.mxu0 0.0
      %648 = vmatpush1.msra.mxu0 0.0
      %649 = vmatprep.subr.mxu0 0.0
      %650 = vmatpush1.msra.mxu0 0.0
      %651 = vmatprep.subr.mxu0 0.0
      %652 = vmatpush1.msra.mxu0 0.0
      %653 = vmatprep.subr.mxu0 0.0
      %654 = vmatpush1.msra.mxu0 0.0
      %655 = vmatprep.mubr.f32.mxu0 0.0
      %656 = vmatmul.mubr.f32.gmra.mrb[0].mxu0 %v589
      %v657 = vpop.f32.mrb[0].mxu0
      %v658 = vadd.f32 0.0, %v657
      %v659 = vpop.f32.mrb[0].mxu0
      %660 = vdwg.mxu0
      %v661 = vld [vmem:[%s317] sm:$0x7]
      %663 = vrot.lane.b32.xlu0 %v658, 32
      %v664 = vpop.permute.xlu0 %663
      %v666 = vadd.f32 %v661, %v664
      %vm667 = vcmask 387328
      %668 = vst.msk [vmem:[%s317] sm:$0x7] %vm667, %v666
      %v669 = vld [vmem:[%s317] sm:$0x7]
      %670 = vrot.lane.b32.xlu0 %v658, 48
      %v671 = vpop.permute.xlu0 %670
      %v673 = vadd.f32 %v669, %v671
      %vm674 = vcmask 518528
      %675 = vst.msk [vmem:[%s317] sm:$0x7] %vm674, %v673
      %v676 = vld [vmem:[%s4] sm:$0xff]
      %677 = vrot.lane.b32.xlu0 %v496, 112
      %v678 = vpop.permute.xlu0 %677
      %v679 = vsel %vm500, %v678, 0
      %681 = vmatprep.subr.mxu0 0.0
      %682 = vmatpush1.msra.mxu0 %v676
      %683 = vmatprep.subr.mxu0 0.0
      %684 = vmatpush1.msra.mxu0 0.0
      %685 = vmatprep.subr.mxu0 0.0
      %686 = vmatpush1.msra.mxu0 0.0
      %687 = vmatprep.subr.mxu0 0.0
      %688 = vmatpush1.msra.mxu0 0.0
      %689 = vmatprep.subr.mxu0 0.0
      %690 = vmatpush1.msra.mxu0 0.0
      %691 = vmatprep.subr.mxu0 0.0
      %692 = vmatpush1.msra.mxu0 0.0
      %693 = vmatprep.subr.mxu0 0.0
      %694 = vmatpush1.msra.mxu0 0.0
      %695 = vmatprep.subr.mxu0 0.0
      %696 = vmatpush1.msra.mxu0 0.0
      %697 = vmatprep.subr.mxu0 0.0
      %698 = vmatpush1.msra.mxu0 0.0
      %699 = vmatprep.subr.mxu0 0.0
      %700 = vmatpush1.msra.mxu0 0.0
      %701 = vmatprep.subr.mxu0 0.0
      %702 = vmatpush1.msra.mxu0 0.0
      %703 = vmatprep.subr.mxu0 0.0
      %704 = vmatpush1.msra.mxu0 0.0
      %705 = vmatprep.subr.mxu0 0.0
      %706 = vmatpush1.msra.mxu0 0.0
      %707 = vmatprep.subr.mxu0 0.0
      %708 = vmatpush1.msra.mxu0 0.0
      %709 = vmatprep.subr.mxu0 0.0
      %710 = vmatpush1.msra.mxu0 0.0
      %711 = vmatprep.subr.mxu0 0.0
      %712 = vmatpush1.msra.mxu0 0.0
      %713 = vmatprep.subr.mxu0 0.0
      %714 = vmatpush1.msra.mxu0 0.0
      %715 = vmatprep.subr.mxu0 0.0
      %716 = vmatpush1.msra.mxu0 0.0
      %717 = vmatprep.subr.mxu0 0.0
      %718 = vmatpush1.msra.mxu0 0.0
      %719 = vmatprep.subr.mxu0 0.0
      %720 = vmatpush1.msra.mxu0 0.0
      %721 = vmatprep.subr.mxu0 0.0
      %722 = vmatpush1.msra.mxu0 0.0
      %723 = vmatprep.subr.mxu0 0.0
      %724 = vmatpush1.msra.mxu0 0.0
      %725 = vmatprep.subr.mxu0 0.0
      %726 = vmatpush1.msra.mxu0 0.0
      %727 = vmatprep.subr.mxu0 0.0
      %728 = vmatpush1.msra.mxu0 0.0
      %729 = vmatprep.subr.mxu0 0.0
      %730 = vmatpush1.msra.mxu0 0.0
      %731 = vmatprep.subr.mxu0 0.0
      %732 = vmatpush1.msra.mxu0 0.0
      %733 = vmatprep.subr.mxu0 0.0
      %734 = vmatpush1.msra.mxu0 0.0
      %735 = vmatprep.subr.mxu0 0.0
      %736 = vmatpush1.msra.mxu0 0.0
      %737 = vmatprep.subr.mxu0 0.0
      %738 = vmatpush1.msra.mxu0 0.0
      %739 = vmatprep.subr.mxu0 0.0
      %740 = vmatpush1.msra.mxu0 0.0
      %741 = vmatprep.subr.mxu0 0.0
      %742 = vmatpush1.msra.mxu0 0.0
      %743 = vmatprep.subr.mxu0 0.0
      %744 = vmatpush1.msra.mxu0 0.0
      %745 = vmatprep.mubr.f32.mxu0 0.0
      %746 = vmatmul.mubr.f32.gmra.mrb[0].mxu0 %v679
      %v747 = vpop.f32.mrb[0].mxu0
      %v748 = vadd.f32 0.0, %v747
      %v749 = vpop.f32.mrb[0].mxu0
      %750 = vdwg.mxu0
      %v751 = vld [vmem:[%s317] sm:$0x7]
      %753 = vrot.lane.b32.xlu0 %v748, 64
      %v754 = vpop.permute.xlu0 %753
      %v756 = vadd.f32 %v751, %v754
      %vm757 = vcmask 649728
      %758 = vst.msk [vmem:[%s317] sm:$0x7] %vm757, %v756
      %v759 = vld [vmem:[%s317] sm:$0x7]
      %760 = vrot.lane.b32.xlu0 %v748, 80
      %v761 = vpop.permute.xlu0 %760
      %v763 = vadd.f32 %v759, %v761
      %vm764 = vcmask 780928
      %765 = vst.msk [vmem:[%s317] sm:$0x7] %vm764, %v763
      %v766 = vld [vmem:[%s4] sm:$0xff]
      %767 = vrot.lane.b32.xlu0 %v496, 104
      %v768 = vpop.permute.xlu0 %767
      %v769 = vsel %vm500, %v768, 0
      %771 = vmatprep.subr.mxu0 0.0
      %772 = vmatpush1.msra.mxu0 %v766
      %773 = vmatprep.subr.mxu0 0.0
      %774 = vmatpush1.msra.mxu0 0.0
      %775 = vmatprep.subr.mxu0 0.0
      %776 = vmatpush1.msra.mxu0 0.0
      %777 = vmatprep.subr.mxu0 0.0
      %778 = vmatpush1.msra.mxu0 0.0
      %779 = vmatprep.subr.mxu0 0.0
      %780 = vmatpush1.msra.mxu0 0.0
      %781 = vmatprep.subr.mxu0 0.0
      %782 = vmatpush1.msra.mxu0 0.0
      %783 = vmatprep.subr.mxu0 0.0
      %784 = vmatpush1.msra.mxu0 0.0
      %785 = vmatprep.subr.mxu0 0.0
      %786 = vmatpush1.msra.mxu0 0.0
      %787 = vmatprep.subr.mxu0 0.0
      %788 = vmatpush1.msra.mxu0 0.0
      %789 = vmatprep.subr.mxu0 0.0
      %790 = vmatpush1.msra.mxu0 0.0
      %791 = vmatprep.subr.mxu0 0.0
      %792 = vmatpush1.msra.mxu0 0.0
      %793 = vmatprep.subr.mxu0 0.0
      %794 = vmatpush1.msra.mxu0 0.0
      %795 = vmatprep.subr.mxu0 0.0
      %796 = vmatpush1.msra.mxu0 0.0
      %797 = vmatprep.subr.mxu0 0.0
      %798 = vmatpush1.msra.mxu0 0.0
      %799 = vmatprep.subr.mxu0 0.0
      %800 = vmatpush1.msra.mxu0 0.0
      %801 = vmatprep.subr.mxu0 0.0
      %802 = vmatpush1.msra.mxu0 0.0
      %803 = vmatprep.subr.mxu0 0.0
      %804 = vmatpush1.msra.mxu0 0.0
      %805 = vmatprep.subr.mxu0 0.0
      %806 = vmatpush1.msra.mxu0 0.0
      %807 = vmatprep.subr.mxu0 0.0
      %808 = vmatpush1.msra.mxu0 0.0
      %809 = vmatprep.subr.mxu0 0.0
      %810 = vmatpush1.msra.mxu0 0.0
      %811 = vmatprep.subr.mxu0 0.0
      %812 = vmatpush1.msra.mxu0 0.0
      %813 = vmatprep.subr.mxu0 0.0
      %814 = vmatpush1.msra.mxu0 0.0
      %815 = vmatprep.subr.mxu0 0.0
      %816 = vmatpush1.msra.mxu0 0.0
      %817 = vmatprep.subr.mxu0 0.0
      %818 = vmatpush1.msra.mxu0 0.0
      %819 = vmatprep.subr.mxu0 0.0
      %820 = vmatpush1.msra.mxu0 0.0
      %821 = vmatprep.subr.mxu0 0.0
      %822 = vmatpush1.msra.mxu0 0.0
      %823 = vmatprep.subr.mxu0 0.0
      %824 = vmatpush1.msra.mxu0 0.0
      %825 = vmatprep.subr.mxu0 0.0
      %826 = vmatpush1.msra.mxu0 0.0
      %827 = vmatprep.subr.mxu0 0.0
      %828 = vmatpush1.msra.mxu0 0.0
      %829 = vmatprep.subr.mxu0 0.0
      %830 = vmatpush1.msra.mxu0 0.0
      %831 = vmatprep.subr.mxu0 0.0
      %832 = vmatpush1.msra.mxu0 0.0
      %833 = vmatprep.subr.mxu0 0.0
      %834 = vmatpush1.msra.mxu0 0.0
      %835 = vmatprep.mubr.f32.mxu0 0.0
      %836 = vmatmul.mubr.f32.gmra.mrb[0].mxu0 %v769
      %v837 = vpop.f32.mrb[0].mxu0
      %v838 = vadd.f32 0.0, %v837
      %v839 = vpop.f32.mrb[0].mxu0
      %840 = vdwg.mxu0
      %v841 = vld [vmem:[%s317] sm:$0x7]
      %843 = vrot.lane.b32.xlu0 %v838, 96
      %v844 = vpop.permute.xlu0 %843
      %v846 = vadd.f32 %v841, %v844
      %vm847 = vcmask 912128
      %848 = vst.msk [vmem:[%s317] sm:$0x7] %vm847, %v846
      %v849 = vld [vmem:[%s317] sm:$0x7]
      %850 = vrot.lane.b32.xlu0 %v838, 112
      %v851 = vpop.permute.xlu0 %850
      %v853 = vadd.f32 %v849, %v851
      %vm854 = vcmask 1043328
      %855 = vst.msk [vmem:[%s317] sm:$0x7] %vm854, %v853
      %v856 = vld [vmem:[%s4] sm:$0xff]
      %857 = vrot.lane.b32.xlu0 %v496, 96
      %v858 = vpop.permute.xlu0 %857
      %v859 = vsel %vm500, %v858, 0
      %861 = vmatprep.subr.mxu0 0.0
      %862 = vmatpush1.msra.mxu0 %v856
      %863 = vmatprep.subr.mxu0 0.0
      %864 = vmatpush1.msra.mxu0 0.0
      %865 = vmatprep.subr.mxu0 0.0
      %866 = vmatpush1.msra.mxu0 0.0
      %867 = vmatprep.subr.mxu0 0.0
      %868 = vmatpush1.msra.mxu0 0.0
      %869 = vmatprep.subr.mxu0 0.0
      %870 = vmatpush1.msra.mxu0 0.0
      %871 = vmatprep.subr.mxu0 0.0
      %872 = vmatpush1.msra.mxu0 0.0
      %873 = vmatprep.subr.mxu0 0.0
      %874 = vmatpush1.msra.mxu0 0.0
      %875 = vmatprep.subr.mxu0 0.0
      %876 = vmatpush1.msra.mxu0 0.0
      %877 = vmatprep.subr.mxu0 0.0
      %878 = vmatpush1.msra.mxu0 0.0
      %879 = vmatprep.subr.mxu0 0.0
      %880 = vmatpush1.msra.mxu0 0.0
      %881 = vmatprep.subr.mxu0 0.0
      %882 = vmatpush1.msra.mxu0 0.0
      %883 = vmatprep.subr.mxu0 0.0
      %884 = vmatpush1.msra.mxu0 0.0
      %885 = vmatprep.subr.mxu0 0.0
      %886 = vmatpush1.msra.mxu0 0.0
      %887 = vmatprep.subr.mxu0 0.0
      %888 = vmatpush1.msra.mxu0 0.0
      %889 = vmatprep.subr.mxu0 0.0
      %890 = vmatpush1.msra.mxu0 0.0
      %891 = vmatprep.subr.mxu0 0.0
      %892 = vmatpush1.msra.mxu0 0.0
      %893 = vmatprep.subr.mxu0 0.0
      %894 = vmatpush1.msra.mxu0 0.0
      %895 = vmatprep.subr.mxu0 0.0
      %896 = vmatpush1.msra.mxu0 0.0
      %897 = vmatprep.subr.mxu0 0.0
      %898 = vmatpush1.msra.mxu0 0.0
      %899 = vmatprep.subr.mxu0 0.0
      %900 = vmatpush1.msra.mxu0 0.0
      %901 = vmatprep.subr.mxu0 0.0
      %902 = vmatpush1.msra.mxu0 0.0
      %903 = vmatprep.subr.mxu0 0.0
      %904 = vmatpush1.msra.mxu0 0.0
      %905 = vmatprep.subr.mxu0 0.0
      %906 = vmatpush1.msra.mxu0 0.0
      %907 = vmatprep.subr.mxu0 0.0
      %908 = vmatpush1.msra.mxu0 0.0
      %909 = vmatprep.subr.mxu0 0.0
      %910 = vmatpush1.msra.mxu0 0.0
      %911 = vmatprep.subr.mxu0 0.0
      %912 = vmatpush1.msra.mxu0 0.0
      %913 = vmatprep.subr.mxu0 0.0
      %914 = vmatpush1.msra.mxu0 0.0
      %915 = vmatprep.subr.mxu0 0.0
      %916 = vmatpush1.msra.mxu0 0.0
      %917 = vmatprep.subr.mxu0 0.0
      %918 = vmatpush1.msra.mxu0 0.0
      %919 = vmatprep.subr.mxu0 0.0
      %920 = vmatpush1.msra.mxu0 0.0
      %921 = vmatprep.subr.mxu0 0.0
      %922 = vmatpush1.msra.mxu0 0.0
      %923 = vmatprep.subr.mxu0 0.0
      %924 = vmatpush1.msra.mxu0 0.0
      %925 = vmatprep.mubr.f32.mxu0 0.0
      %926 = vmatmul.mubr.f32.gmra.mrb[0].mxu0 %v859
      %v927 = vpop.f32.mrb[0].mxu0
      %v928 = vadd.f32 0.0, %v927
      %v929 = vpop.f32.mrb[0].mxu0
      %930 = vdwg.mxu0
      %v931 = vld [vmem:[%s317 + $0x4] sm:$0x7]
      %v932 = vadd.f32 %v931, %v928
      %933 = vst.msk [vmem:[%s317 + $0x4] sm:$0x7] %vm576, %v932
      %v934 = vld [vmem:[%s317 + $0x4] sm:$0x7]
      %936 = vrot.lane.b32.xlu0 %v928, 16
      %v937 = vpop.permute.xlu0 %936
      %v939 = vadd.f32 %v934, %v937
      %940 = vst.msk [vmem:[%s317 + $0x4] sm:$0x7] %vm584, %v939
      %v941 = vld [vmem:[%s4] sm:$0xff]
      %942 = vrot.lane.b32.xlu0 %v496, 88
      %v943 = vpop.permute.xlu0 %942
      %v944 = vsel %vm500, %v943, 0
      %946 = vmatprep.subr.mxu0 0.0
      %947 = vmatpush1.msra.mxu0 %v941
      %948 = vmatprep.subr.mxu0 0.0
      %949 = vmatpush1.msra.mxu0 0.0
      %950 = vmatprep.subr.mxu0 0.0
      %951 = vmatpush1.msra.mxu0 0.0
      %952 = vmatprep.subr.mxu0 0.0
      %953 = vmatpush1.msra.mxu0 0.0
      %954 = vmatprep.subr.mxu0 0.0
      %955 = vmatpush1.msra.mxu0 0.0
      %956 = vmatprep.subr.mxu0 0.0
      %957 = vmatpush1.msra.mxu0 0.0
      %958 = vmatprep.subr.mxu0 0.0
      %959 = vmatpush1.msra.mxu0 0.0
      %960 = vmatprep.subr.mxu0 0.0
      %961 = vmatpush1.msra.mxu0 0.0
      %962 = vmatprep.subr.mxu0 0.0
      %963 = vmatpush1.msra.mxu0 0.0
      %964 = vmatprep.subr.mxu0 0.0
      %965 = vmatpush1.msra.mxu0 0.0
      %966 = vmatprep.subr.mxu0 0.0
      %967 = vmatpush1.msra.mxu0 0.0
      %968 = vmatprep.subr.mxu0 0.0
      %969 = vmatpush1.msra.mxu0 0.0
      %970 = vmatprep.subr.mxu0 0.0
      %971 = vmatpush1.msra.mxu0 0.0
      %972 = vmatprep.subr.mxu0 0.0
      %973 = vmatpush1.msra.mxu0 0.0
      %974 = vmatprep.subr.mxu0 0.0
      %975 = vmatpush1.msra.mxu0 0.0
      %976 = vmatprep.subr.mxu0 0.0
      %977 = vmatpush1.msra.mxu0 0.0
      %978 = vmatprep.subr.mxu0 0.0
      %979 = vmatpush1.msra.mxu0 0.0
      %980 = vmatprep.subr.mxu0 0.0
      %981 = vmatpush1.msra.mxu0 0.0
      %982 = vmatprep.subr.mxu0 0.0
      %983 = vmatpush1.msra.mxu0 0.0
      %984 = vmatprep.subr.mxu0 0.0
      %985 = vmatpush1.msra.mxu0 0.0
      %986 = vmatprep.subr.mxu0 0.0
      %987 = vmatpush1.msra.mxu0 0.0
      %988 = vmatprep.subr.mxu0 0.0
      %989 = vmatpush1.msra.mxu0 0.0
      %990 = vmatprep.subr.mxu0 0.0
      %991 = vmatpush1.msra.mxu0 0.0
      %992 = vmatprep.subr.mxu0 0.0
      %993 = vmatpush1.msra.mxu0 0.0
      %994 = vmatprep.subr.mxu0 0.0
      %995 = vmatpush1.msra.mxu0 0.0
      %996 = vmatprep.subr.mxu0 0.0
      %997 = vmatpush1.msra.mxu0 0.0
      %998 = vmatprep.subr.mxu0 0.0
      %999 = vmatpush1.msra.mxu0 0.0
      %1000 = vmatprep.subr.mxu0 0.0
      %1001 = vmatpush1.msra.mxu0 0.0
      %1002 = vmatprep.subr.mxu0 0.0
      %1003 = vmatpush1.msra.mxu0 0.0
      %1004 = vmatprep.subr.mxu0 0.0
      %1005 = vmatpush1.msra.mxu0 0.0
      %1006 = vmatprep.subr.mxu0 0.0
      %1007 = vmatpush1.msra.mxu0 0.0
      %1008 = vmatprep.subr.mxu0 0.0
      %1009 = vmatpush1.msra.mxu0 0.0
      %1010 = vmatprep.mubr.f32.mxu0 0.0
      %1011 = vmatmul.mubr.f32.gmra.mrb[0].mxu0 %v944
      %v1012 = vpop.f32.mrb[0].mxu0
      %v1013 = vadd.f32 0.0, %v1012
      %v1014 = vpop.f32.mrb[0].mxu0
      %1015 = vdwg.mxu0
      %v1016 = vld [vmem:[%s317 + $0x4] sm:$0x7]
      %1018 = vrot.lane.b32.xlu0 %v1013, 32
      %v1019 = vpop.permute.xlu0 %1018
      %v1021 = vadd.f32 %v1016, %v1019
      %1022 = vst.msk [vmem:[%s317 + $0x4] sm:$0x7] %vm667, %v1021
      %v1023 = vld [vmem:[%s317 + $0x4] sm:$0x7]
      %1024 = vrot.lane.b32.xlu0 %v1013, 48
      %v1025 = vpop.permute.xlu0 %1024
      %v1027 = vadd.f32 %v1023, %v1025
      %1028 = vst.msk [vmem:[%s317 + $0x4] sm:$0x7] %vm674, %v1027
      %v1029 = vld [vmem:[%s4] sm:$0xff]
      %1030 = vrot.lane.b32.xlu0 %v496, 80
      %v1031 = vpop.permute.xlu0 %1030
      %v1032 = vsel %vm500, %v1031, 0
      %1034 = vmatprep.subr.mxu0 0.0
      %1035 = vmatpush1.msra.mxu0 %v1029
      %1036 = vmatprep.subr.mxu0 0.0
      %1037 = vmatpush1.msra.mxu0 0.0
      %1038 = vmatprep.subr.mxu0 0.0
      %1039 = vmatpush1.msra.mxu0 0.0
      %1040 = vmatprep.subr.mxu0 0.0
      %1041 = vmatpush1.msra.mxu0 0.0
      %1042 = vmatprep.subr.mxu0 0.0
      %1043 = vmatpush1.msra.mxu0 0.0
      %1044 = vmatprep.subr.mxu0 0.0
      %1045 = vmatpush1.msra.mxu0 0.0
      %1046 = vmatprep.subr.mxu0 0.0
      %1047 = vmatpush1.msra.mxu0 0.0
      %1048 = vmatprep.subr.mxu0 0.0
      %1049 = vmatpush1.msra.mxu0 0.0
      %1050 = vmatprep.subr.mxu0 0.0
      %1051 = vmatpush1.msra.mxu0 0.0
      %1052 = vmatprep.subr.mxu0 0.0
      %1053 = vmatpush1.msra.mxu0 0.0
      %1054 = vmatprep.subr.mxu0 0.0
      %1055 = vmatpush1.msra.mxu0 0.0
      %1056 = vmatprep.subr.mxu0 0.0
      %1057 = vmatpush1.msra.mxu0 0.0
      %1058 = vmatprep.subr.mxu0 0.0
      %1059 = vmatpush1.msra.mxu0 0.0
      %1060 = vmatprep.subr.mxu0 0.0
      %1061 = vmatpush1.msra.mxu0 0.0
      %1062 = vmatprep.subr.mxu0 0.0
      %1063 = vmatpush1.msra.mxu0 0.0
      %1064 = vmatprep.subr.mxu0 0.0
      %1065 = vmatpush1.msra.mxu0 0.0
      %1066 = vmatprep.subr.mxu0 0.0
      %1067 = vmatpush1.msra.mxu0 0.0
      %1068 = vmatprep.subr.mxu0 0.0
      %1069 = vmatpush1.msra.mxu0 0.0
      %1070 = vmatprep.subr.mxu0 0.0
      %1071 = vmatpush1.msra.mxu0 0.0
      %1072 = vmatprep.subr.mxu0 0.0
      %1073 = vmatpush1.msra.mxu0 0.0
      %1074 = vmatprep.subr.mxu0 0.0
      %1075 = vmatpush1.msra.mxu0 0.0
      %1076 = vmatprep.subr.mxu0 0.0
      %1077 = vmatpush1.msra.mxu0 0.0
      %1078 = vmatprep.subr.mxu0 0.0
      %1079 = vmatpush1.msra.mxu0 0.0
      %1080 = vmatprep.subr.mxu0 0.0
      %1081 = vmatpush1.msra.mxu0 0.0
      %1082 = vmatprep.subr.mxu0 0.0
      %1083 = vmatpush1.msra.mxu0 0.0
      %1084 = vmatprep.subr.mxu0 0.0
      %1085 = vmatpush1.msra.mxu0 0.0
      %1086 = vmatprep.subr.mxu0 0.0
      %1087 = vmatpush1.msra.mxu0 0.0
      %1088 = vmatprep.subr.mxu0 0.0
      %1089 = vmatpush1.msra.mxu0 0.0
      %1090 = vmatprep.subr.mxu0 0.0
      %1091 = vmatpush1.msra.mxu0 0.0
      %1092 = vmatprep.subr.mxu0 0.0
      %1093 = vmatpush1.msra.mxu0 0.0
      %1094 = vmatprep.subr.mxu0 0.0
      %1095 = vmatpush1.msra.mxu0 0.0
      %1096 = vmatprep.subr.mxu0 0.0
      %1097 = vmatpush1.msra.mxu0 0.0
      %1098 = vmatprep.mubr.f32.mxu0 0.0
      %1099 = vmatmul.mubr.f32.gmra.mrb[0].mxu0 %v1032
      %v1100 = vpop.f32.mrb[0].mxu0
      %v1101 = vadd.f32 0.0, %v1100
      %v1102 = vpop.f32.mrb[0].mxu0
      %1103 = vdwg.mxu0
      %v1104 = vld [vmem:[%s317 + $0x4] sm:$0x7]
      %1106 = vrot.lane.b32.xlu0 %v1101, 64
      %v1107 = vpop.permute.xlu0 %1106
      %v1109 = vadd.f32 %v1104, %v1107
      %1110 = vst.msk [vmem:[%s317 + $0x4] sm:$0x7] %vm757, %v1109
      %v1111 = vld [vmem:[%s317 + $0x4] sm:$0x7]
      %1112 = vrot.lane.b32.xlu0 %v1101, 80
      %v1113 = vpop.permute.xlu0 %1112
      %v1115 = vadd.f32 %v1111, %v1113
      %1116 = vst.msk [vmem:[%s317 + $0x4] sm:$0x7] %vm764, %v1115
      %v1117 = vld [vmem:[%s4] sm:$0xff]
      %1118 = vrot.lane.b32.xlu0 %v496, 72
      %v1119 = vpop.permute.xlu0 %1118
      %v1120 = vsel %vm500, %v1119, 0
      %1122 = vmatprep.subr.mxu0 0.0
      %1123 = vmatpush1.msra.mxu0 %v1117
      %1124 = vmatprep.subr.mxu0 0.0
      %1125 = vmatpush1.msra.mxu0 0.0
      %1126 = vmatprep.subr.mxu0 0.0
      %1127 = vmatpush1.msra.mxu0 0.0
      %1128 = vmatprep.subr.mxu0 0.0
      %1129 = vmatpush1.msra.mxu0 0.0
      %1130 = vmatprep.subr.mxu0 0.0
      %1131 = vmatpush1.msra.mxu0 0.0
      %1132 = vmatprep.subr.mxu0 0.0
      %1133 = vmatpush1.msra.mxu0 0.0
      %1134 = vmatprep.subr.mxu0 0.0
      %1135 = vmatpush1.msra.mxu0 0.0
      %1136 = vmatprep.subr.mxu0 0.0
      %1137 = vmatpush1.msra.mxu0 0.0
      %1138 = vmatprep.subr.mxu0 0.0
      %1139 = vmatpush1.msra.mxu0 0.0
      %1140 = vmatprep.subr.mxu0 0.0
      %1141 = vmatpush1.msra.mxu0 0.0
      %1142 = vmatprep.subr.mxu0 0.0
      %1143 = vmatpush1.msra.mxu0 0.0
      %1144 = vmatprep.subr.mxu0 0.0
      %1145 = vmatpush1.msra.mxu0 0.0
      %1146 = vmatprep.subr.mxu0 0.0
      %1147 = vmatpush1.msra.mxu0 0.0
      %1148 = vmatprep.subr.mxu0 0.0
      %1149 = vmatpush1.msra.mxu0 0.0
      %1150 = vmatprep.subr.mxu0 0.0
      %1151 = vmatpush1.msra.mxu0 0.0
      %1152 = vmatprep.subr.mxu0 0.0
      %1153 = vmatpush1.msra.mxu0 0.0
      %1154 = vmatprep.subr.mxu0 0.0
      %1155 = vmatpush1.msra.mxu0 0.0
      %1156 = vmatprep.subr.mxu0 0.0
      %1157 = vmatpush1.msra.mxu0 0.0
      %1158 = vmatprep.subr.mxu0 0.0
      %1159 = vmatpush1.msra.mxu0 0.0
      %1160 = vmatprep.subr.mxu0 0.0
      %1161 = vmatpush1.msra.mxu0 0.0
      %1162 = vmatprep.subr.mxu0 0.0
      %1163 = vmatpush1.msra.mxu0 0.0
      %1164 = vmatprep.subr.mxu0 0.0
      %1165 = vmatpush1.msra.mxu0 0.0
      %1166 = vmatprep.subr.mxu0 0.0
      %1167 = vmatpush1.msra.mxu0 0.0
      %1168 = vmatprep.subr.mxu0 0.0
      %1169 = vmatpush1.msra.mxu0 0.0
      %1170 = vmatprep.subr.mxu0 0.0
      %1171 = vmatpush1.msra.mxu0 0.0
      %1172 = vmatprep.subr.mxu0 0.0
      %1173 = vmatpush1.msra.mxu0 0.0
      %1174 = vmatprep.subr.mxu0 0.0
      %1175 = vmatpush1.msra.mxu0 0.0
      %1176 = vmatprep.subr.mxu0 0.0
      %1177 = vmatpush1.msra.mxu0 0.0
      %1178 = vmatprep.subr.mxu0 0.0
      %1179 = vmatpush1.msra.mxu0 0.0
      %1180 = vmatprep.subr.mxu0 0.0
      %1181 = vmatpush1.msra.mxu0 0.0
      %1182 = vmatprep.subr.mxu0 0.0
      %1183 = vmatpush1.msra.mxu0 0.0
      %1184 = vmatprep.subr.mxu0 0.0
      %1185 = vmatpush1.msra.mxu0 0.0
      %1186 = vmatprep.mubr.f32.mxu0 0.0
      %1187 = vmatmul.mubr.f32.gmra.mrb[0].mxu0 %v1120
      %v1188 = vpop.f32.mrb[0].mxu0
      %v1189 = vadd.f32 0.0, %v1188
      %v1190 = vpop.f32.mrb[0].mxu0
      %1191 = vdwg.mxu0
      %v1192 = vld [vmem:[%s317 + $0x4] sm:$0x7]
      %1194 = vrot.lane.b32.xlu0 %v1189, 96
      %v1195 = vpop.permute.xlu0 %1194
      %v1197 = vadd.f32 %v1192, %v1195
      %1198 = vst.msk [vmem:[%s317 + $0x4] sm:$0x7] %vm847, %v1197
      %v1199 = vld [vmem:[%s317 + $0x4] sm:$0x7]
      %1200 = vrot.lane.b32.xlu0 %v1189, 112
      %v1201 = vpop.permute.xlu0 %1200
      %v1203 = vadd.f32 %v1199, %v1201
      %1204 = vst.msk [vmem:[%s317 + $0x4] sm:$0x7] %vm854, %v1203
      %s1205 = smul.u32 2, %s22
      %p1206 = scmp.lt.s32.totalorder %s21, 1
      %s1207 = scalar_select %p1206, %s21, 1
      %p1208 = scmp.lt.s32.totalorder %s1205, 1
      %s1209 = scalar_select %p1208, %s1205, 1
      %s1210 = smul.addr %s1207, 2
      %s1211 = sadd.s32 %s1209, %s1210
      %s1212 = smul.addr %s1211, 4
      %s1213 = scalar_lea.vmem %s6, %s1212
      // Predicated region
      $region45: #{tpu_custom_call.1} parent=43 // pred_check
        %p1214 = pneg %p189
      $region46: #{tpu_custom_call.1} parent=43 // pred_check_branch
        %1216 = sbr.rel (%p1214) target = $region48
      $region47: #{tpu_custom_call.1} parent=43 // pred_region
        %s1217 = smul.u32 2, %s22
      $region48: #{tpu_custom_call.1} parent=43 // pred_fallthru
        _
    $region44: #{tpu_custom_call.1} parent=5 // pred_fallthru
      _
    %p1218 = scmp.le.s32.totalorder 2, %s12
    // Predicated region
    $region49: #{tpu_custom_call.1} parent=5 // pred_check
      %p1219 = pneg %p1218
    $region50: #{tpu_custom_call.1} parent=5 // pred_check_branch
      %1221 = sbr.rel (%p1219) target = $region52
    $region51: #{tpu_custom_call.1} parent=5 // pred_region
      %s1222 = ssub.s32 %s12, 2
      // Predicated region
      $region53: #{tpu_custom_call.1} parent=51 // pred_check
        %p1223 = pneg %p195
      $region54: #{tpu_custom_call.1} parent=51 // pred_check_branch
        %1225 = sbr.rel (%p1223) target = $region56
      $region55: #{tpu_custom_call.1} parent=51 // pred_region
        %s1226 = smul.u32 2, %s24
        %p1227 = scmp.lt.s32.totalorder %s23, 1
        %s1228 = scalar_select %p1227, %s23, 1
        %p1229 = scmp.lt.s32.totalorder %s1226, 1
        %s1230 = scalar_select %p1229, %s1226, 1
        %s1231 = smul.addr %s1228, 2
        %s1232 = sadd.s32 %s1230, %s1231
        %s1233 = smul.addr %s1232, 4
        %s1234 = scalar_lea.vmem %s6, %s1233
      $region56: #{tpu_custom_call.1} parent=51 // pred_fallthru
        _
    $region52: #{tpu_custom_call.1} parent=5 // pred_fallthru
      _
  $region6: #{tpu_custom_call.1} parent=0 // loop_footer
    %s16 = sadd.s32 1, %s12
  $region7: #{tpu_custom_call.1} parent=0 // loop_footer_branch
    %11 = sbr.rel target = $region3
  $region8: #{tpu_custom_call.1} parent=0 // loop_exit
    _

</llo_original>
